<compile_context>
chip_gen: v6e
topology: v6e:2x2x1
jax: 0.10.0
libtpu: 0.0.40
codegen_flags: <defaults>
</compile_context>

<pallas_src>
import functools
import math

import jax
import jax.numpy as jnp
from jax import lax
from jax.experimental import pallas as pl
from jax.experimental.pallas import tpu as pltpu

_NEG_PAD = -1.0e30  # bias for padded token columns -> exp() underflows to exactly 0


def _round_up(x, m):
    return ((x + m - 1) // m) * m


# -----------------------------------------------------------------------------
# Fused kernel: Elman RNN + token-tiled decoder matmul + two-pass log_softmax
# -----------------------------------------------------------------------------
def _rnn_lm_kernel(emb_ref, wih_ref, whh_ref, brnn_ref, h0_ref,
                   wdec_ref, bdec_ref,              # inputs
                   logp_ref, hN_ref,                # outputs
                   h_scr, act_scr, m_scr, l_scr,    # VMEM scratch
                   *, seq_len, batch_pad, unroll):
    # emb_ref : (S*B_pad, ninp_pad)        wih_ref : (ninp_pad, nhid_pad)
    # whh_ref : (nhid_pad, nhid_pad)       brnn_ref: (1, nhid_pad) f32
    # h0_ref  : (B_pad, nhid_pad) f32
    # wdec_ref: (nhid_pad, t_tile)         bdec_ref: (1, t_tile) f32
    # logp_ref: (S*B_pad, t_tile) f32      hN_ref  : (B_pad, nhid_pad) f32
    # h_scr   : (B_pad, nhid_pad) f32      act_scr : (S*B_pad, nhid_pad) f32
    # m_scr/l_scr : (S*B_pad, 1) f32       (running max / running exp-sum)
    p = pl.program_id(0)   # 0: logsumexp stats pass, 1: write pass
    j = pl.program_id(1)   # token tile index
    cdt = wih_ref.dtype    # matmul-operand dtype (f32 or bf16), accumulation is f32

    @pl.when(jnp.logical_and(p == 0, j == 0))
    def _recurrence():
        # Hoisted input projection: one large M = S*B_pad matmul (+ bias) into scratch.
        act_scr[...] = (
            jnp.dot(emb_ref[...], wih_ref[...], preferred_element_type=jnp.float32)
            + brnn_ref[...])
        h_scr[...] = h0_ref[...]

        def step(t, carry):
            off = pl.multiple_of(t * batch_pad, batch_pad)     # sublane-aligned offset
            pre = act_scr[pl.ds(off, batch_pad), :] + jnp.dot(
                h_scr[...].astype(cdt), whh_ref[...],
                preferred_element_type=jnp.float32)
            h = jnp.tanh(pre)                                   # (B_pad, nhid_pad)
            h_scr[...] = h
            act_scr[pl.ds(off, batch_pad), :] = h               # PyTorch (s, b) flatten order
            return carry

        lax.fori_loop(0, seq_len, step, 0, unroll=unroll)
        hN_ref[...] = h_scr[...].astype(hN_ref.dtype)
        m_scr[...] = jnp.full_like(m_scr, -jnp.inf)
        l_scr[...] = jnp.zeros_like(l_scr)

    # Decoder matmul for this token tile (needed by both passes).
    logits = (jnp.dot(act_scr[...].astype(cdt), wdec_ref[...],
                      preferred_element_type=jnp.float32)
              + bdec_ref[...])                                   # (S*B_pad, t_tile) f32

    @pl.when(p == 0)
    def _stats():
        m_tile = jnp.max(logits, axis=-1, keepdims=True)
        m_new = jnp.maximum(m_scr[...], m_tile)
        l_scr[...] = (l_scr[...] * jnp.exp(m_scr[...] - m_new)
                      + jnp.sum(jnp.exp(logits - m_new), axis=-1, keepdims=True))
        m_scr[...] = m_new

    @pl.when(p == 1)
    def _write():
        logp_ref[...] = (logits - m_scr[...] - jnp.log(l_scr[...])
                         ).astype(logp_ref.dtype)


# -----------------------------------------------------------------------------
# Wrapper
# -----------------------------------------------------------------------------
def rnn_model_forward(input_ids, hidden, kparams, *, ntoken, nhid, token_tile):
    """input_ids: (S, B) int32, hidden: (1, B, nhid) f32 (nlayers=1, unidirectional)."""
    emb_tbl = kparams["emb"]          # (ntoken, ninp_pad), matmul dtype
    w_ih_t = kparams["w_ih_t"]        # (ninp_pad, nhid_pad)
    w_hh_t = kparams["w_hh_t"]        # (nhid_pad, nhid_pad)
    b_rnn = kparams["b_rnn"]          # (1, nhid_pad) f32
    w_dec_t = kparams["w_dec_t"]      # (nhid_pad, t_pad)
    b_dec = kparams["b_dec_pad"]      # (1, t_pad) f32

    S, B = input_ids.shape
    ninp_pad = emb_tbl.shape[1]
    nhid_pad = w_hh_t.shape[0]
    t_pad = w_dec_t.shape[1]
    assert t_pad % token_tile == 0
    n_tok = t_pad // token_tile
    B_pad = max(8, _round_up(B, 8))
    cdt = w_ih_t.dtype
    itemsize = jnp.dtype(cdt).itemsize

    # Embedding gather (XLA) + zero-pad batch, flatten to the (s, b) row order.
    emb = emb_tbl[input_ids]                                    # (S, B, ninp_pad)
    if B_pad != B:
        emb = jnp.pad(emb, ((0, 0), (0, B_pad - B), (0, 0)))
    emb_flat = emb.reshape(S * B_pad, ninp_pad)

    h0 = jnp.pad(hidden[0].astype(jnp.float32),
                 ((0, B_pad - B), (0, nhid_pad - nhid)))        # (B_pad, nhid_pad)

    # Cost / VMEM bookkeeping.
    flops = (2 * S * B_pad * ninp_pad * nhid_pad
             + S * 2 * B_pad * nhid_pad * nhid_pad
             + 2 * 2 * S * B_pad * nhid_pad * t_pad)            # two decoder passes
    transcendentals = S * B_pad * nhid_pad + 3 * S * B_pad * t_pad
    bytes_accessed = (emb_flat.size * itemsize + w_ih_t.size * itemsize
                      + w_hh_t.size * itemsize + w_dec_t.size * itemsize
                      + 4 * (b_rnn.size + b_dec.size + h0.size
                             + S * B_pad * t_pad + B_pad * nhid_pad))

    block_bytes = (S * B_pad * ninp_pad * itemsize          # emb
                   + ninp_pad * nhid_pad * itemsize         # W_ih
                   + nhid_pad * nhid_pad * itemsize         # W_hh
                   + nhid_pad * 4                           # b_rnn
                   + B_pad * nhid_pad * 4                   # h0
                   + nhid_pad * token_tile * itemsize       # W_dec tile
                   + token_tile * 4                         # b_dec tile
                   + S * B_pad * token_tile * 4             # logp tile
                   + B_pad * nhid_pad * 4)                  # hN
    scratch_bytes = 4 * (B_pad * nhid_pad + S * B_pad * nhid_pad + 2 * S * B_pad)
    vmem_limit = int(min(128 * 1024 * 1024,
                         max(32 * 1024 * 1024,
                             2 * block_bytes + scratch_bytes + (4 << 20))))

    kernel = functools.partial(_rnn_lm_kernel, seq_len=S, batch_pad=B_pad,
                               unroll=min(S, 8))

    logp_pad, h_n = pl.pallas_call(
        kernel,
        out_shape=(
            jax.ShapeDtypeStruct((S * B_pad, t_pad), jnp.float32),
            jax.ShapeDtypeStruct((B_pad, nhid_pad), jnp.float32),
        ),
        grid_spec=pltpu.PrefetchScalarGridSpec(
            num_scalar_prefetch=0,
            grid=(2, n_tok),                                   # (pass, token tile)
            in_specs=[
                pl.BlockSpec((S * B_pad, ninp_pad), lambda p, j: (0, 0)),   # emb (resident)
                pl.BlockSpec((ninp_pad, nhid_pad), lambda p, j: (0, 0)),    # W_ih^T
                pl.BlockSpec((nhid_pad, nhid_pad), lambda p, j: (0, 0)),    # W_hh^T
                pl.BlockSpec((1, nhid_pad), lambda p, j: (0, 0)),           # b_ih + b_hh
                pl.BlockSpec((B_pad, nhid_pad), lambda p, j: (0, 0)),       # h0
                pl.BlockSpec((nhid_pad, token_tile), lambda p, j: (0, j)),  # W_dec^T (streamed)
                pl.BlockSpec((1, token_tile), lambda p, j: (0, j)),         # decoder bias
            ],
            out_specs=(
                pl.BlockSpec((S * B_pad, token_tile), lambda p, j: (0, j)), # log-probs
                pl.BlockSpec((B_pad, nhid_pad), lambda p, j: (0, 0)),       # h_N
            ),
            scratch_shapes=[
                pltpu.VMEM((B_pad, nhid_pad), jnp.float32),        # hidden state
                pltpu.VMEM((S * B_pad, nhid_pad), jnp.float32),    # staged RNN outputs
                pltpu.VMEM((S * B_pad, 1), jnp.float32),           # running max
                pltpu.VMEM((S * B_pad, 1), jnp.float32),           # running exp-sum
            ],
        ),
        compiler_params=pltpu.CompilerParams(
            dimension_semantics=("arbitrary", "arbitrary"),
            vmem_limit_bytes=vmem_limit),
        cost_estimate=pl.CostEstimate(
            flops=int(flops),
            transcendentals=int(transcendentals),
            bytes_accessed=int(bytes_accessed)),
    )(emb_flat, w_ih_t, w_hh_t, b_rnn, h0, w_dec_t, b_dec)

    # Drop batch / lane / hidden padding; restore PyTorch output shapes.
    log_probs = logp_pad.reshape(S, B_pad, t_pad)[:, :B, :ntoken].reshape(S * B, ntoken)
    hidden_out = h_n[:B, :nhid][None]                          # (1, B, nhid)
    return log_probs, hidden_out


# -----------------------------------------------------------------------------
# Parameters (mirror the PyTorch module's init_weights / nn.RNN defaults)
# -----------------------------------------------------------------------------
def make_params(key, *, ntoken, ninp, nhid):
    ks = jax.random.split(key, 6)
    initrange = 0.1
    stdv = 1.0 / math.sqrt(nhid)
    return {
        "emb":   jax.random.uniform(ks[0], (ntoken, ninp), jnp.float32, -initrange, initrange),
        "w_ih":  jax.random.uniform(ks[1], (nhid, ninp), jnp.float32, -stdv, stdv),
        "w_hh":  jax.random.uniform(ks[2], (nhid, nhid), jnp.float32, -stdv, stdv),
        "b_ih":  jax.random.uniform(ks[3], (nhid,), jnp.float32, -stdv, stdv),
        "b_hh":  jax.random.uniform(ks[4], (nhid,), jnp.float32, -stdv, stdv),
        "w_dec": jax.random.uniform(ks[5], (ntoken, nhid), jnp.float32, -initrange, initrange),
        "b_dec": jnp.zeros((ntoken,), jnp.float32),
    }


def prepare_kernel_params(params, *, token_tile=512, lane=128, matmul_dtype=jnp.float32):
    """One-time prep: pre-transpose weights to (in, out), pad ninp/nhid to 128,
    pad token dim to a multiple of token_tile, combine RNN biases, optional bf16."""
    assert token_tile % lane == 0
    ntoken, ninp = params["emb"].shape
    nhid = params["w_hh"].shape[0]
    ninp_pad = _round_up(ninp, lane)
    nhid_pad = _round_up(nhid, lane)
    t_pad = _round_up(ntoken, token_tile)

    emb = jnp.zeros((ntoken, ninp_pad), matmul_dtype).at[:, :ninp].set(
        params["emb"].astype(matmul_dtype))
    w_ih_t = jnp.zeros((ninp_pad, nhid_pad), matmul_dtype).at[:ninp, :nhid].set(
        params["w_ih"].T.astype(matmul_dtype))
    w_hh_t = jnp.zeros((nhid_pad, nhid_pad), matmul_dtype).at[:nhid, :nhid].set(
        params["w_hh"].T.astype(matmul_dtype))
    b_rnn = jnp.zeros((1, nhid_pad), jnp.float32).at[0, :nhid].set(
        params["b_ih"] + params["b_hh"])
    w_dec_t = jnp.zeros((nhid_pad, t_pad), matmul_dtype).at[:nhid, :ntoken].set(
        params["w_dec"].T.astype(matmul_dtype))
    b_dec_pad = jnp.full((1, t_pad), _NEG_PAD, jnp.float32).at[0, :ntoken].set(
        params["b_dec"])
    return {"emb": emb, "w_ih_t": w_ih_t, "w_hh_t": w_hh_t, "b_rnn": b_rnn,
            "w_dec_t": w_dec_t, "b_dec_pad": b_dec_pad}


# -----------------------------------------------------------------------------
# Pure-JAX reference of the module forward (for correctness check)
# -----------------------------------------------------------------------------
def reference_forward(input_ids, hidden, params, *, ntoken):
    emb = params["emb"][input_ids]                            # (S, B, ninp)

    def step(h, x_t):
        h_new = jnp.tanh(x_t @ params["w_ih"].T + params["b_ih"]
                         + h @ params["w_hh"].T + params["b_hh"])
        return h_new, h_new

    h_n, outs = lax.scan(step, hidden[0], emb)                # outs: (S, B, nhid)
    decoded = outs @ params["w_dec"].T + params["b_dec"]      # (S, B, ntoken)
    logp = jax.nn.log_softmax(decoded.reshape(-1, ntoken), axis=1)
    return logp, h_n[None]


if __name__ == "__main__":
    # Small shapes consistent with the module: seq=8, batch=2, hidden=32.
    # ntoken=200 with token_tile=128 -> T_pad=256, 2 streamed decoder tiles.
    S, B = 8, 2
    ntoken, ninp, nhid = 200, 32, 32
    token_tile = 128

    key = jax.random.PRNGKey(0)
    k_ids, k_par = jax.random.split(key)
    input_ids = jax.random.randint(k_ids, (S, B), 0, ntoken, jnp.int32)
    params = make_params(k_par, ntoken=ntoken, ninp=ninp, nhid=nhid)
    hidden0 = jnp.zeros((1, B, nhid), jnp.float32)            # init_hidden (nlayers=1, D=1)

    ref_lp, ref_h = reference_forward(input_ids, hidden0, params, ntoken=ntoken)

    fwd = jax.jit(functools.partial(rnn_model_forward, ntoken=ntoken, nhid=nhid,
                                    token_tile=token_tile))

    # f32 path: tight correctness check against the pure-JAX reference.
    kp32 = prepare_kernel_params(params, token_tile=token_tile,
                                 matmul_dtype=jnp.float32)
    lp32, h32 = fwd(input_ids, hidden0, kp32)
    lp32 = jax.block_until_ready(lp32)
    h32 = jax.block_until_ready(h32)
    assert lp32.shape == (S * B, ntoken)
    assert h32.shape == (1, B, nhid)
    assert jnp.allclose(lp32, ref_lp, atol=1e-4, rtol=1e-4)
    assert jnp.allclose(h32, ref_h, atol=1e-4, rtol=1e-4)

    # bf16 matmul-operand path (f32 accumulation / softmax stats): looser check.
    kp16 = prepare_kernel_params(params, token_tile=token_tile,
                                 matmul_dtype=jnp.bfloat16)
    lp16, h16 = fwd(input_ids, hidden0, kp16)
    lp16 = jax.block_until_ready(lp16)
    h16 = jax.block_until_ready(h16)
    assert lp16.shape == (S * B, ntoken)
    assert bool(jnp.all(jnp.isfinite(lp16)))
    assert jnp.allclose(lp16, ref_lp, atol=0.25)
    assert jnp.allclose(h16, ref_h, atol=0.05)

    print("KERNEL_OK")
</pallas_src>

<mosaic_0001>
module attributes {stable_mosaic.version = 11 : i64} {
  func.func @_rnn_lm_kernel(%arg0: i32, %arg1: i32, %arg2: memref<64x128xf32, #tpu.memory_space<vmem>>, %arg3: memref<128x128xf32, #tpu.memory_space<vmem>>, %arg4: memref<128x128xf32, #tpu.memory_space<vmem>>, %arg5: memref<1x128xf32, #tpu.memory_space<vmem>>, %arg6: memref<8x128xf32, #tpu.memory_space<vmem>>, %arg7: memref<128x128xf32, #tpu.memory_space<vmem>>, %arg8: memref<1x128xf32, #tpu.memory_space<vmem>>, %arg9: memref<64x128xf32, #tpu.memory_space<vmem>>, %arg10: memref<8x128xf32, #tpu.memory_space<vmem>>, %arg11: memref<8x128xf32, #tpu.memory_space<vmem>>, %arg12: memref<64x128xf32, #tpu.memory_space<vmem>>, %arg13: memref<64x1xf32, #tpu.memory_space<vmem>>, %arg14: memref<64x1xf32, #tpu.memory_space<vmem>>) attributes {dimension_semantics = [#tpu.dimension_semantics<arbitrary>, #tpu.dimension_semantics<arbitrary>], iteration_bounds = array<i64: 2, 2>, scalar_prefetch = 0 : i64, scratch_operands = 4 : i64, tpu.core_type = #tpu.core_type<tc>, window_params = [{pipeline_mode = #tpu.pipeline_mode<synchronous>, transform_indices = @transform_0, window_bounds = array<i64: 64, 128>}, {pipeline_mode = #tpu.pipeline_mode<synchronous>, transform_indices = @transform_1, window_bounds = array<i64: 128, 128>}, {pipeline_mode = #tpu.pipeline_mode<synchronous>, transform_indices = @transform_2, window_bounds = array<i64: 128, 128>}, {pipeline_mode = #tpu.pipeline_mode<synchronous>, transform_indices = @transform_3, window_bounds = array<i64: 1, 128>}, {pipeline_mode = #tpu.pipeline_mode<synchronous>, transform_indices = @transform_4, window_bounds = array<i64: 8, 128>}, {transform_indices = @transform_5, window_bounds = array<i64: 128, 128>}, {transform_indices = @transform_6, window_bounds = array<i64: 1, 128>}, {transform_indices = @transform_7, window_bounds = array<i64: 64, 128>}, {pipeline_mode = #tpu.pipeline_mode<synchronous>, transform_indices = @transform_8, window_bounds = array<i64: 8, 128>}]} {
    %c0_i32 = arith.constant 0 : i32
    %0 = arith.cmpi eq, %arg0, %c0_i32 : i32
    %c0_i32_0 = arith.constant 0 : i32
    %1 = arith.cmpi eq, %arg1, %c0_i32_0 : i32
    %2 = arith.andi %0, %1 : i1
    %3 = arith.extui %2 : i1 to i32
    %c0_i32_1 = arith.constant 0 : i32
    %4 = arith.cmpi ne, %3, %c0_i32_1 : i32
    scf.if %4 {
      %c0_10 = arith.constant 0 : index
      %c0_11 = arith.constant 0 : index
      %17 = vector.load %arg2[%c0_10, %c0_11] : memref<64x128xf32, #tpu.memory_space<vmem>>, vector<64x128xf32>
      %c0_12 = arith.constant 0 : index
      %c0_13 = arith.constant 0 : index
      %18 = vector.load %arg3[%c0_12, %c0_13] : memref<128x128xf32, #tpu.memory_space<vmem>>, vector<128x128xf32>
      %cst_14 = arith.constant dense<0.000000e+00> : vector<64x128xf32>
      %19 = tpu.matmul %17, %18, %cst_14 {dimension_numbers = #tpu.dot_dimension_numbers<[1], [0], [0], [1], [0, 0, 1, 1], [], []>} : vector<64x128xf32>, vector<128x128xf32>, vector<64x128xf32> -> vector<64x128xf32>
      %c0_15 = arith.constant 0 : index
      %c0_16 = arith.constant 0 : index
      %20 = vector.load %arg5[%c0_15, %c0_16] : memref<1x128xf32, #tpu.memory_space<vmem>>, vector<1x128xf32>
      %21 = vector.broadcast %20 : vector<1x128xf32> to vector<64x128xf32>
      %22 = arith.addf %19, %21 : vector<64x128xf32>
      %c0_17 = arith.constant 0 : index
      %c0_18 = arith.constant 0 : index
      %23 = vector.load %arg12[%c0_17, %c0_18] : memref<64x128xf32, #tpu.memory_space<vmem>>, vector<64x128xf32>
      tpu.vector_store %arg12[%c0_17, %c0_18], %22 {strides = array<i32>} : memref<64x128xf32, #tpu.memory_space<vmem>>, vector<64x128xf32>,
      %c0_19 = arith.constant 0 : index
      %c0_20 = arith.constant 0 : index
      %24 = vector.load %arg6[%c0_19, %c0_20] : memref<8x128xf32, #tpu.memory_space<vmem>>, vector<8x128xf32>
      %c0_21 = arith.constant 0 : index
      %c0_22 = arith.constant 0 : index
      %25 = vector.load %arg11[%c0_21, %c0_22] : memref<8x128xf32, #tpu.memory_space<vmem>>, vector<8x128xf32>
      tpu.vector_store %arg11[%c0_21, %c0_22], %24 {strides = array<i32>} : memref<8x128xf32, #tpu.memory_space<vmem>>, vector<8x128xf32>,
      %c0_i32_23 = arith.constant 0 : i32
      %c8_i32 = arith.constant 8 : i32
      %26 = arith.muli %c0_i32_23, %c8_i32 : i32
      %27 = tpu.assume_multiple %26, 8 : i32
      %28 = arith.index_cast %27 : i32 to index
      %c0_24 = arith.constant 0 : index
      %29 = vector.load %arg12[%28, %c0_24] : memref<64x128xf32, #tpu.memory_space<vmem>>, vector<8x128xf32>
      %c0_25 = arith.constant 0 : index
      %c0_26 = arith.constant 0 : index
      %30 = vector.load %arg11[%c0_25, %c0_26] : memref<8x128xf32, #tpu.memory_space<vmem>>, vector<8x128xf32>
      %c0_27 = arith.constant 0 : index
      %c0_28 = arith.constant 0 : index
      %31 = vector.load %arg4[%c0_27, %c0_28] : memref<128x128xf32, #tpu.memory_space<vmem>>, vector<128x128xf32>
      %cst_29 = arith.constant dense<0.000000e+00> : vector<8x128xf32>
      %32 = tpu.matmul %30, %31, %cst_29 {dimension_numbers = #tpu.dot_dimension_numbers<[1], [0], [0], [1], [0, 0, 1, 1], [], []>} : vector<8x128xf32>, vector<128x128xf32>, vector<8x128xf32> -> vector<8x128xf32>
      %33 = arith.addf %29, %32 : vector<8x128xf32>
      %34 = math.tanh %33 : vector<8x128xf32>
      %c0_30 = arith.constant 0 : index
      %c0_31 = arith.constant 0 : index
      %35 = vector.load %arg11[%c0_30, %c0_31] : memref<8x128xf32, #tpu.memory_space<vmem>>, vector<8x128xf32>
      tpu.vector_store %arg11[%c0_30, %c0_31], %34 {strides = array<i32>} : memref<8x128xf32, #tpu.memory_space<vmem>>, vector<8x128xf32>,
      %36 = arith.index_cast %27 : i32 to index
      %c0_32 = arith.constant 0 : index
      %37 = vector.load %arg12[%36, %c0_32] : memref<64x128xf32, #tpu.memory_space<vmem>>, vector<8x128xf32>
      tpu.vector_store %arg12[%36, %c0_32], %34 {strides = array<i32>} : memref<64x128xf32, #tpu.memory_space<vmem>>, vector<8x128xf32>,
      %c1_i32_33 = arith.constant 1 : i32
      %c8_i32_34 = arith.constant 8 : i32
      %38 = arith.muli %c1_i32_33, %c8_i32_34 : i32
      %39 = tpu.assume_multiple %38, 8 : i32
      %40 = arith.index_cast %39 : i32 to index
      %c0_35 = arith.constant 0 : index
      %41 = vector.load %arg12[%40, %c0_35] : memref<64x128xf32, #tpu.memory_space<vmem>>, vector<8x128xf32>
      %c0_36 = arith.constant 0 : index
      %c0_37 = arith.constant 0 : index
      %42 = vector.load %arg11[%c0_36, %c0_37] : memref<8x128xf32, #tpu.memory_space<vmem>>, vector<8x128xf32>
      %c0_38 = arith.constant 0 : index
      %c0_39 = arith.constant 0 : index
      %43 = vector.load %arg4[%c0_38, %c0_39] : memref<128x128xf32, #tpu.memory_space<vmem>>, vector<128x128xf32>
      %cst_40 = arith.constant dense<0.000000e+00> : vector<8x128xf32>
      %44 = tpu.matmul %42, %43, %cst_40 {dimension_numbers = #tpu.dot_dimension_numbers<[1], [0], [0], [1], [0, 0, 1, 1], [], []>} : vector<8x128xf32>, vector<128x128xf32>, vector<8x128xf32> -> vector<8x128xf32>
      %45 = arith.addf %41, %44 : vector<8x128xf32>
      %46 = math.tanh %45 : vector<8x128xf32>
      %c0_41 = arith.constant 0 : index
      %c0_42 = arith.constant 0 : index
      %47 = vector.load %arg11[%c0_41, %c0_42] : memref<8x128xf32, #tpu.memory_space<vmem>>, vector<8x128xf32>
      tpu.vector_store %arg11[%c0_41, %c0_42], %46 {strides = array<i32>} : memref<8x128xf32, #tpu.memory_space<vmem>>, vector<8x128xf32>,
      %48 = arith.index_cast %39 : i32 to index
      %c0_43 = arith.constant 0 : index
      %49 = vector.load %arg12[%48, %c0_43] : memref<64x128xf32, #tpu.memory_space<vmem>>, vector<8x128xf32>
      tpu.vector_store %arg12[%48, %c0_43], %46 {strides = array<i32>} : memref<64x128xf32, #tpu.memory_space<vmem>>, vector<8x128xf32>,
      %c2_i32 = arith.constant 2 : i32
      %c8_i32_44 = arith.constant 8 : i32
      %50 = arith.muli %c2_i32, %c8_i32_44 : i32
      %51 = tpu.assume_multiple %50, 8 : i32
      %52 = arith.index_cast %51 : i32 to index
      %c0_45 = arith.constant 0 : index
      %53 = vector.load %arg12[%52, %c0_45] : memref<64x128xf32, #tpu.memory_space<vmem>>, vector<8x128xf32>
      %c0_46 = arith.constant 0 : index
      %c0_47 = arith.constant 0 : index
      %54 = vector.load %arg11[%c0_46, %c0_47] : memref<8x128xf32, #tpu.memory_space<vmem>>, vector<8x128xf32>
      %c0_48 = arith.constant 0 : index
      %c0_49 = arith.constant 0 : index
      %55 = vector.load %arg4[%c0_48, %c0_49] : memref<128x128xf32, #tpu.memory_space<vmem>>, vector<128x128xf32>
      %cst_50 = arith.constant dense<0.000000e+00> : vector<8x128xf32>
      %56 = tpu.matmul %54, %55, %cst_50 {dimension_numbers = #tpu.dot_dimension_numbers<[1], [0], [0], [1], [0, 0, 1, 1], [], []>} : vector<8x128xf32>, vector<128x128xf32>, vector<8x128xf32> -> vector<8x128xf32>
      %57 = arith.addf %53, %56 : vector<8x128xf32>
      %58 = math.tanh %57 : vector<8x128xf32>
      %c0_51 = arith.constant 0 : index
      %c0_52 = arith.constant 0 : index
      %59 = vector.load %arg11[%c0_51, %c0_52] : memref<8x128xf32, #tpu.memory_space<vmem>>, vector<8x128xf32>
      tpu.vector_store %arg11[%c0_51, %c0_52], %58 {strides = array<i32>} : memref<8x128xf32, #tpu.memory_space<vmem>>, vector<8x128xf32>,
      %60 = arith.index_cast %51 : i32 to index
      %c0_53 = arith.constant 0 : index
      %61 = vector.load %arg12[%60, %c0_53] : memref<64x128xf32, #tpu.memory_space<vmem>>, vector<8x128xf32>
      tpu.vector_store %arg12[%60, %c0_53], %58 {strides = array<i32>} : memref<64x128xf32, #tpu.memory_space<vmem>>, vector<8x128xf32>,
      %c3_i32 = arith.constant 3 : i32
      %c8_i32_54 = arith.constant 8 : i32
      %62 = arith.muli %c3_i32, %c8_i32_54 : i32
      %63 = tpu.assume_multiple %62, 8 : i32
      %64 = arith.index_cast %63 : i32 to index
      %c0_55 = arith.constant 0 : index
      %65 = vector.load %arg12[%64, %c0_55] : memref<64x128xf32, #tpu.memory_space<vmem>>, vector<8x128xf32>
      %c0_56 = arith.constant 0 : index
      %c0_57 = arith.constant 0 : index
      %66 = vector.load %arg11[%c0_56, %c0_57] : memref<8x128xf32, #tpu.memory_space<vmem>>, vector<8x128xf32>
      %c0_58 = arith.constant 0 : index
      %c0_59 = arith.constant 0 : index
      %67 = vector.load %arg4[%c0_58, %c0_59] : memref<128x128xf32, #tpu.memory_space<vmem>>, vector<128x128xf32>
      %cst_60 = arith.constant dense<0.000000e+00> : vector<8x128xf32>
      %68 = tpu.matmul %66, %67, %cst_60 {dimension_numbers = #tpu.dot_dimension_numbers<[1], [0], [0], [1], [0, 0, 1, 1], [], []>} : vector<8x128xf32>, vector<128x128xf32>, vector<8x128xf32> -> vector<8x128xf32>
      %69 = arith.addf %65, %68 : vector<8x128xf32>
      %70 = math.tanh %69 : vector<8x128xf32>
      %c0_61 = arith.constant 0 : index
      %c0_62 = arith.constant 0 : index
      %71 = vector.load %arg11[%c0_61, %c0_62] : memref<8x128xf32, #tpu.memory_space<vmem>>, vector<8x128xf32>
      tpu.vector_store %arg11[%c0_61, %c0_62], %70 {strides = array<i32>} : memref<8x128xf32, #tpu.memory_space<vmem>>, vector<8x128xf32>,
      %72 = arith.index_cast %63 : i32 to index
      %c0_63 = arith.constant 0 : index
      %73 = vector.load %arg12[%72, %c0_63] : memref<64x128xf32, #tpu.memory_space<vmem>>, vector<8x128xf32>
      tpu.vector_store %arg12[%72, %c0_63], %70 {strides = array<i32>} : memref<64x128xf32, #tpu.memory_space<vmem>>, vector<8x128xf32>,
      %c4_i32 = arith.constant 4 : i32
      %c8_i32_64 = arith.constant 8 : i32
      %74 = arith.muli %c4_i32, %c8_i32_64 : i32
      %75 = tpu.assume_multiple %74, 8 : i32
      %76 = arith.index_cast %75 : i32 to index
      %c0_65 = arith.constant 0 : index
      %77 = vector.load %arg12[%76, %c0_65] : memref<64x128xf32, #tpu.memory_space<vmem>>, vector<8x128xf32>
      %c0_66 = arith.constant 0 : index
      %c0_67 = arith.constant 0 : index
      %78 = vector.load %arg11[%c0_66, %c0_67] : memref<8x128xf32, #tpu.memory_space<vmem>>, vector<8x128xf32>
      %c0_68 = arith.constant 0 : index
      %c0_69 = arith.constant 0 : index
      %79 = vector.load %arg4[%c0_68, %c0_69] : memref<128x128xf32, #tpu.memory_space<vmem>>, vector<128x128xf32>
      %cst_70 = arith.constant dense<0.000000e+00> : vector<8x128xf32>
      %80 = tpu.matmul %78, %79, %cst_70 {dimension_numbers = #tpu.dot_dimension_numbers<[1], [0], [0], [1], [0, 0, 1, 1], [], []>} : vector<8x128xf32>, vector<128x128xf32>, vector<8x128xf32> -> vector<8x128xf32>
      %81 = arith.addf %77, %80 : vector<8x128xf32>
      %82 = math.tanh %81 : vector<8x128xf32>
      %c0_71 = arith.constant 0 : index
      %c0_72 = arith.constant 0 : index
      %83 = vector.load %arg11[%c0_71, %c0_72] : memref<8x128xf32, #tpu.memory_space<vmem>>, vector<8x128xf32>
      tpu.vector_store %arg11[%c0_71, %c0_72], %82 {strides = array<i32>} : memref<8x128xf32, #tpu.memory_space<vmem>>, vector<8x128xf32>,
      %84 = arith.index_cast %75 : i32 to index
      %c0_73 = arith.constant 0 : index
      %85 = vector.load %arg12[%84, %c0_73] : memref<64x128xf32, #tpu.memory_space<vmem>>, vector<8x128xf32>
      tpu.vector_store %arg12[%84, %c0_73], %82 {strides = array<i32>} : memref<64x128xf32, #tpu.memory_space<vmem>>, vector<8x128xf32>,
      %c5_i32 = arith.constant 5 : i32
      %c8_i32_74 = arith.constant 8 : i32
      %86 = arith.muli %c5_i32, %c8_i32_74 : i32
      %87 = tpu.assume_multiple %86, 8 : i32
      %88 = arith.index_cast %87 : i32 to index
      %c0_75 = arith.constant 0 : index
      %89 = vector.load %arg12[%88, %c0_75] : memref<64x128xf32, #tpu.memory_space<vmem>>, vector<8x128xf32>
      %c0_76 = arith.constant 0 : index
      %c0_77 = arith.constant 0 : index
      %90 = vector.load %arg11[%c0_76, %c0_77] : memref<8x128xf32, #tpu.memory_space<vmem>>, vector<8x128xf32>
      %c0_78 = arith.constant 0 : index
      %c0_79 = arith.constant 0 : index
      %91 = vector.load %arg4[%c0_78, %c0_79] : memref<128x128xf32, #tpu.memory_space<vmem>>, vector<128x128xf32>
      %cst_80 = arith.constant dense<0.000000e+00> : vector<8x128xf32>
      %92 = tpu.matmul %90, %91, %cst_80 {dimension_numbers = #tpu.dot_dimension_numbers<[1], [0], [0], [1], [0, 0, 1, 1], [], []>} : vector<8x128xf32>, vector<128x128xf32>, vector<8x128xf32> -> vector<8x128xf32>
      %93 = arith.addf %89, %92 : vector<8x128xf32>
      %94 = math.tanh %93 : vector<8x128xf32>
      %c0_81 = arith.constant 0 : index
      %c0_82 = arith.constant 0 : index
      %95 = vector.load %arg11[%c0_81, %c0_82] : memref<8x128xf32, #tpu.memory_space<vmem>>, vector<8x128xf32>
      tpu.vector_store %arg11[%c0_81, %c0_82], %94 {strides = array<i32>} : memref<8x128xf32, #tpu.memory_space<vmem>>, vector<8x128xf32>,
      %96 = arith.index_cast %87 : i32 to index
      %c0_83 = arith.constant 0 : index
      %97 = vector.load %arg12[%96, %c0_83] : memref<64x128xf32, #tpu.memory_space<vmem>>, vector<8x128xf32>
      tpu.vector_store %arg12[%96, %c0_83], %94 {strides = array<i32>} : memref<64x128xf32, #tpu.memory_space<vmem>>, vector<8x128xf32>,
      %c6_i32 = arith.constant 6 : i32
      %c8_i32_84 = arith.constant 8 : i32
      %98 = arith.muli %c6_i32, %c8_i32_84 : i32
      %99 = tpu.assume_multiple %98, 8 : i32
      %100 = arith.index_cast %99 : i32 to index
      %c0_85 = arith.constant 0 : index
      %101 = vector.load %arg12[%100, %c0_85] : memref<64x128xf32, #tpu.memory_space<vmem>>, vector<8x128xf32>
      %c0_86 = arith.constant 0 : index
      %c0_87 = arith.constant 0 : index
      %102 = vector.load %arg11[%c0_86, %c0_87] : memref<8x128xf32, #tpu.memory_space<vmem>>, vector<8x128xf32>
      %c0_88 = arith.constant 0 : index
      %c0_89 = arith.constant 0 : index
      %103 = vector.load %arg4[%c0_88, %c0_89] : memref<128x128xf32, #tpu.memory_space<vmem>>, vector<128x128xf32>
      %cst_90 = arith.constant dense<0.000000e+00> : vector<8x128xf32>
      %104 = tpu.matmul %102, %103, %cst_90 {dimension_numbers = #tpu.dot_dimension_numbers<[1], [0], [0], [1], [0, 0, 1, 1], [], []>} : vector<8x128xf32>, vector<128x128xf32>, vector<8x128xf32> -> vector<8x128xf32>
      %105 = arith.addf %101, %104 : vector<8x128xf32>
      %106 = math.tanh %105 : vector<8x128xf32>
      %c0_91 = arith.constant 0 : index
      %c0_92 = arith.constant 0 : index
      %107 = vector.load %arg11[%c0_91, %c0_92] : memref<8x128xf32, #tpu.memory_space<vmem>>, vector<8x128xf32>
      tpu.vector_store %arg11[%c0_91, %c0_92], %106 {strides = array<i32>} : memref<8x128xf32, #tpu.memory_space<vmem>>, vector<8x128xf32>,
      %108 = arith.index_cast %99 : i32 to index
      %c0_93 = arith.constant 0 : index
      %109 = vector.load %arg12[%108, %c0_93] : memref<64x128xf32, #tpu.memory_space<vmem>>, vector<8x128xf32>
      tpu.vector_store %arg12[%108, %c0_93], %106 {strides = array<i32>} : memref<64x128xf32, #tpu.memory_space<vmem>>, vector<8x128xf32>,
      %c7_i32 = arith.constant 7 : i32
      %c8_i32_94 = arith.constant 8 : i32
      %110 = arith.muli %c7_i32, %c8_i32_94 : i32
      %111 = tpu.assume_multiple %110, 8 : i32
      %112 = arith.index_cast %111 : i32 to index
      %c0_95 = arith.constant 0 : index
      %113 = vector.load %arg12[%112, %c0_95] : memref<64x128xf32, #tpu.memory_space<vmem>>, vector<8x128xf32>
      %c0_96 = arith.constant 0 : index
      %c0_97 = arith.constant 0 : index
      %114 = vector.load %arg11[%c0_96, %c0_97] : memref<8x128xf32, #tpu.memory_space<vmem>>, vector<8x128xf32>
      %c0_98 = arith.constant 0 : index
      %c0_99 = arith.constant 0 : index
      %115 = vector.load %arg4[%c0_98, %c0_99] : memref<128x128xf32, #tpu.memory_space<vmem>>, vector<128x128xf32>
      %cst_100 = arith.constant dense<0.000000e+00> : vector<8x128xf32>
      %116 = tpu.matmul %114, %115, %cst_100 {dimension_numbers = #tpu.dot_dimension_numbers<[1], [0], [0], [1], [0, 0, 1, 1], [], []>} : vector<8x128xf32>, vector<128x128xf32>, vector<8x128xf32> -> vector<8x128xf32>
      %117 = arith.addf %113, %116 : vector<8x128xf32>
      %118 = math.tanh %117 : vector<8x128xf32>
      %c0_101 = arith.constant 0 : index
      %c0_102 = arith.constant 0 : index
      %119 = vector.load %arg11[%c0_101, %c0_102] : memref<8x128xf32, #tpu.memory_space<vmem>>, vector<8x128xf32>
      tpu.vector_store %arg11[%c0_101, %c0_102], %118 {strides = array<i32>} : memref<8x128xf32, #tpu.memory_space<vmem>>, vector<8x128xf32>,
      %120 = arith.index_cast %111 : i32 to index
      %c0_103 = arith.constant 0 : index
      %121 = vector.load %arg12[%120, %c0_103] : memref<64x128xf32, #tpu.memory_space<vmem>>, vector<8x128xf32>
      tpu.vector_store %arg12[%120, %c0_103], %118 {strides = array<i32>} : memref<64x128xf32, #tpu.memory_space<vmem>>, vector<8x128xf32>,
      %c8_i32_104 = arith.constant 8 : i32
      %c0_105 = arith.constant 0 : index
      %c0_106 = arith.constant 0 : index
      %122 = vector.load %arg11[%c0_105, %c0_106] : memref<8x128xf32, #tpu.memory_space<vmem>>, vector<8x128xf32>
      %c0_107 = arith.constant 0 : index
      %c0_108 = arith.constant 0 : index
      %123 = vector.load %arg10[%c0_107, %c0_108] : memref<8x128xf32, #tpu.memory_space<vmem>>, vector<8x128xf32>
      tpu.vector_store %arg10[%c0_107, %c0_108], %122 {strides = array<i32>} : memref<8x128xf32, #tpu.memory_space<vmem>>, vector<8x128xf32>,
      %cst_109 = arith.constant 0xFF800000 : f32
      %124 = vector.broadcast %cst_109 : f32 to vector<64x1xf32>
      %c0_110 = arith.constant 0 : index
      %c0_111 = arith.constant 0 : index
      %125 = vector.load %arg13[%c0_110, %c0_111] : memref<64x1xf32, #tpu.memory_space<vmem>>, vector<64x1xf32>
      tpu.vector_store %arg13[%c0_110, %c0_111], %124 {strides = array<i32>} : memref<64x1xf32, #tpu.memory_space<vmem>>, vector<64x1xf32>,
      %cst_112 = arith.constant 0.000000e+00 : f32
      %126 = vector.broadcast %cst_112 : f32 to vector<64x1xf32>
      %c0_113 = arith.constant 0 : index
      %c0_114 = arith.constant 0 : index
      %127 = vector.load %arg14[%c0_113, %c0_114] : memref<64x1xf32, #tpu.memory_space<vmem>>, vector<64x1xf32>
      tpu.vector_store %arg14[%c0_113, %c0_114], %126 {strides = array<i32>} : memref<64x1xf32, #tpu.memory_space<vmem>>, vector<64x1xf32>,
    } else {
    }
    %c0 = arith.constant 0 : index
    %c0_2 = arith.constant 0 : index
    %5 = vector.load %arg12[%c0, %c0_2] : memref<64x128xf32, #tpu.memory_space<vmem>>, vector<64x128xf32>
    %c0_3 = arith.constant 0 : index
    %c0_4 = arith.constant 0 : index
    %6 = vector.load %arg7[%c0_3, %c0_4] : memref<128x128xf32, #tpu.memory_space<vmem>>, vector<128x128xf32>
    %cst = arith.constant dense<0.000000e+00> : vector<64x128xf32>
    %7 = tpu.matmul %5, %6, %cst {dimension_numbers = #tpu.dot_dimension_numbers<[1], [0], [0], [1], [0, 0, 1, 1], [], []>} : vector<64x128xf32>, vector<128x128xf32>, vector<64x128xf32> -> vector<64x128xf32>
    %c0_5 = arith.constant 0 : index
    %c0_6 = arith.constant 0 : index
    %8 = vector.load %arg8[%c0_5, %c0_6] : memref<1x128xf32, #tpu.memory_space<vmem>>, vector<1x128xf32>
    %9 = vector.broadcast %8 : vector<1x128xf32> to vector<64x128xf32>
    %10 = arith.addf %7, %9 : vector<64x128xf32>
    %c0_i32_7 = arith.constant 0 : i32
    %11 = arith.cmpi eq, %arg0, %c0_i32_7 : i32
    %12 = arith.extui %11 : i1 to i32
    %c0_i32_8 = arith.constant 0 : i32
    %13 = arith.cmpi ne, %12, %c0_i32_8 : i32
    scf.if %13 {
      %cst_10 = arith.constant dense<0xFF800000> : vector<64xf32>
      %17 = vector.multi_reduction <maximumf>, %10, %cst_10 [1] : vector<64x128xf32> to vector<64xf32>
      %18 = vector.shape_cast %17 : vector<64xf32> to vector<64x1xf32>
      %c0_11 = arith.constant 0 : index
      %c0_12 = arith.constant 0 : index
      %19 = vector.load %arg13[%c0_11, %c0_12] : memref<64x1xf32, #tpu.memory_space<vmem>>, vector<64x1xf32>
      %20 = arith.maximumf %19, %18 : vector<64x1xf32>
      %c0_13 = arith.constant 0 : index
      %c0_14 = arith.constant 0 : index
      %21 = vector.load %arg14[%c0_13, %c0_14] : memref<64x1xf32, #tpu.memory_space<vmem>>, vector<64x1xf32>
      %c0_15 = arith.constant 0 : index
      %c0_16 = arith.constant 0 : index
      %22 = vector.load %arg13[%c0_15, %c0_16] : memref<64x1xf32, #tpu.memory_space<vmem>>, vector<64x1xf32>
      %23 = arith.subf %22, %20 : vector<64x1xf32>
      %24 = math.exp %23 : vector<64x1xf32>
      %25 = arith.mulf %21, %24 : vector<64x1xf32>
      %26 = vector.broadcast %20 : vector<64x1xf32> to vector<64x128xf32>
      %27 = arith.subf %10, %26 : vector<64x128xf32>
      %28 = math.exp %27 : vector<64x128xf32>
      %cst_17 = arith.constant dense<0.000000e+00> : vector<64xf32>
      %29 = vector.multi_reduction <add>, %28, %cst_17 [1] : vector<64x128xf32> to vector<64xf32>
      %30 = vector.shape_cast %29 : vector<64xf32> to vector<64x1xf32>
      %31 = arith.addf %25, %30 : vector<64x1xf32>
      %c0_18 = arith.constant 0 : index
      %c0_19 = arith.constant 0 : index
      %32 = vector.load %arg14[%c0_18, %c0_19] : memref<64x1xf32, #tpu.memory_space<vmem>>, vector<64x1xf32>
      tpu.vector_store %arg14[%c0_18, %c0_19], %31 {strides = array<i32>} : memref<64x1xf32, #tpu.memory_space<vmem>>, vector<64x1xf32>,
      %c0_20 = arith.constant 0 : index
      %c0_21 = arith.constant 0 : index
      %33 = vector.load %arg13[%c0_20, %c0_21] : memref<64x1xf32, #tpu.memory_space<vmem>>, vector<64x1xf32>
      tpu.vector_store %arg13[%c0_20, %c0_21], %20 {strides = array<i32>} : memref<64x1xf32, #tpu.memory_space<vmem>>, vector<64x1xf32>,
    } else {
    }
    %c1_i32 = arith.constant 1 : i32
    %14 = arith.cmpi eq, %arg0, %c1_i32 : i32
    %15 = arith.extui %14 : i1 to i32
    %c0_i32_9 = arith.constant 0 : i32
    %16 = arith.cmpi ne, %15, %c0_i32_9 : i32
    scf.if %16 {
      %c0_10 = arith.constant 0 : index
      %c0_11 = arith.constant 0 : index
      %17 = vector.load %arg13[%c0_10, %c0_11] : memref<64x1xf32, #tpu.memory_space<vmem>>, vector<64x1xf32>
      %18 = vector.broadcast %17 : vector<64x1xf32> to vector<64x128xf32>
      %19 = arith.subf %10, %18 : vector<64x128xf32>
      %c0_12 = arith.constant 0 : index
      %c0_13 = arith.constant 0 : index
      %20 = vector.load %arg14[%c0_12, %c0_13] : memref<64x1xf32, #tpu.memory_space<vmem>>, vector<64x1xf32>
      %21 = math.log %20 : vector<64x1xf32>
      %22 = vector.broadcast %21 : vector<64x1xf32> to vector<64x128xf32>
      %23 = arith.subf %19, %22 : vector<64x128xf32>
      %c0_14 = arith.constant 0 : index
      %c0_15 = arith.constant 0 : index
      %24 = vector.load %arg9[%c0_14, %c0_15] : memref<64x128xf32, #tpu.memory_space<vmem>>, vector<64x128xf32>
      tpu.vector_store %arg9[%c0_14, %c0_15], %23 {strides = array<i32>} : memref<64x128xf32, #tpu.memory_space<vmem>>, vector<64x128xf32>,
    } else {
    }
    return
  }
  func.func @transform_0(%arg0: i32, %arg1: i32) -> (i32, i32) {
    %c0_i32 = arith.constant 0 : i32
    %c0_i32_0 = arith.constant 0 : i32
    %c0_i32_1 = arith.constant 0 : i32
    return %c0_i32, %c0_i32_0 : i32, i32
  }
  func.func @transform_1(%arg0: i32, %arg1: i32) -> (i32, i32) {
    %c0_i32 = arith.constant 0 : i32
    %c0_i32_0 = arith.constant 0 : i32
    %c0_i32_1 = arith.constant 0 : i32
    return %c0_i32, %c0_i32_0 : i32, i32
  }
  func.func @transform_2(%arg0: i32, %arg1: i32) -> (i32, i32) {
    %c0_i32 = arith.constant 0 : i32
    %c0_i32_0 = arith.constant 0 : i32
    %c0_i32_1 = arith.constant 0 : i32
    return %c0_i32, %c0_i32_0 : i32, i32
  }
  func.func @transform_3(%arg0: i32, %arg1: i32) -> (i32, i32) {
    %c0_i32 = arith.constant 0 : i32
    %c0_i32_0 = arith.constant 0 : i32
    %c0_i32_1 = arith.constant 0 : i32
    return %c0_i32, %c0_i32_0 : i32, i32
  }
  func.func @transform_4(%arg0: i32, %arg1: i32) -> (i32, i32) {
    %c0_i32 = arith.constant 0 : i32
    %c0_i32_0 = arith.constant 0 : i32
    %c0_i32_1 = arith.constant 0 : i32
    return %c0_i32, %c0_i32_0 : i32, i32
  }
  func.func @transform_5(%arg0: i32, %arg1: i32) -> (i32, i32) {
    %c0_i32 = arith.constant 0 : i32
    %c0_i32_0 = arith.constant 0 : i32
    return %c0_i32, %arg1 : i32, i32
  }
  func.func @transform_6(%arg0: i32, %arg1: i32) -> (i32, i32) {
    %c0_i32 = arith.constant 0 : i32
    %c0_i32_0 = arith.constant 0 : i32
    return %c0_i32, %arg1 : i32, i32
  }
  func.func @transform_7(%arg0: i32, %arg1: i32) -> (i32, i32) {
    %c0_i32 = arith.constant 0 : i32
    %c0_i32_0 = arith.constant 0 : i32
    return %c0_i32, %arg1 : i32, i32
  }
  func.func @transform_8(%arg0: i32, %arg1: i32) -> (i32, i32) {
    %c0_i32 = arith.constant 0 : i32
    %c0_i32_0 = arith.constant 0 : i32
    %c0_i32_1 = arith.constant 0 : i32
    return %c0_i32, %c0_i32_0 : i32, i32
  }
}

</mosaic_0001>

<llo_original>
// kernel: rnn_model_forward.1
$region0: #{rnn_model_forward.1}
  #allocation0 [shape = 'u32[]', space=smem, size = 0x4, offset = 0x4, fixed_abs, tag = 'smem constant byte address 0x4 - core index']
  #allocation1 [shape = 'u32[144,128]{1,0:T(1,128)}', space=vmem, size = 0x12000, scoped, tag = 'internal scratch']
  #allocation2 [shape = 'f32[8,128]{1,0:T(8,128)}', space=vmem, size = 0x1000, scoped, tag = 'scratch operand']
  #allocation3 [shape = 'f32[64,128]{1,0:T(8,128)}', space=vmem, size = 0x8000, scoped, tag = 'scratch operand']
  #allocation4 [shape = 'f32[64,1]{1,0:T(8,128)}', space=vmem, size = 0x8000, scoped, tag = 'scratch operand']
  #allocation5 [shape = 'f32[64,1]{1,0:T(8,128)}', space=vmem, size = 0x8000, scoped, tag = 'scratch operand']
  %s0 = inlined_call_operand.vmem [shape: f32[64,128], index: 0, kind: input, shape index: {}]
  %s1 = inlined_call_operand.hbm [shape: f32[128,128], index: 1, kind: input, shape index: {}]
  %s2 = inlined_call_operand.hbm [shape: f32[128,128], index: 2, kind: input, shape index: {}]
  %s3 = inlined_call_operand.vmem [shape: f32[1,128], index: 3, kind: input, shape index: {}]
  %s4 = inlined_call_operand.vmem [shape: f32[8,128], index: 4, kind: input, shape index: {}]
  %s5 = inlined_call_operand.vmem [shape: f32[128,256], index: 5, kind: input, shape index: {}]
  %s6 = inlined_call_operand.vmem [shape: f32[1,256], index: 6, kind: input, shape index: {}]
  %s7 = inlined_call_operand.vmem [shape: f32[64,256], index: 7, kind: output, shape index: {0}]
  %s8 = inlined_call_operand.vmem [shape: f32[8,128], index: 8, kind: output, shape index: {1}]
  %9 = xla_tuple %s7, %s8
  %s10 = sld [smem:[#allocation0]]
  $region161: #{rnn_model_forward.1} parent=0
    _
  %s12 = ssub.s32 1, %s10
  %s13 = scalar_select 0, %s12, %s10
  $region1: #{rnn_model_forward.1} parent=0
    #allocation6 [shape = 'u8[65536]{0}', space=vmem, size = 0x10000, scoped, tag = 'input window, operand 1, single buffered']
    #allocation7 [shape = 's32[2]{0}', space=sflag, size = 0x8, scoped, tag = 'scoped memory for rnn_model_forward.1']
    #allocation8 [shape = 'u8[65536]{0}', space=vmem, size = 0x10000, scoped, tag = 'input window, operand 2, single buffered']
    #allocation9 [shape = 's32[1]{0}', space=sflag, size = 0x4, scoped, tag = 'scoped memory for rnn_model_forward.1']
    #allocation10 [shape = 'u8[131072]{0}', space=vmem, size = 0x20000, scoped, tag = 'input window, operand 5']
    #allocation11 [shape = 'u8[65536]{0}', space=vmem, size = 0x10000, scoped, tag = 'output window, operand 0']
    %14 = vsyncpa [#allocation7], 0
    %15 = vsyncpa [#allocation9], 0
    loop: start=0, step=1, limit=6
    $region2: #{rnn_model_forward.1} parent=1 // loop_pre_header
      _
    $region3: #{rnn_model_forward.1} parent=1 // loop_header
      %s17 = sphi 0, %s21
      %p18 = scmp.ge.s32.totalorder %s17, 6
      %s24 = sphi 0, %s36
      %s25 = sphi 0, %s32
      %s26 = sphi 0, %s24
      %s27 = sphi 0, %s25
      %s28 = sphi 0, %s26
      %s29 = sphi 0, %s27
      %s37 = sphi 0, %s37
      %s39 = sphi 0, %s37
      %s40 = sphi 0, %s39
      %s54 = sphi 0, %s40
      %s58 = sphi 0, %s58
      %s60 = sphi 0, %s58
      %s61 = sphi 0, %s60
      %s75 = sphi 0, %s61
      %s79 = sphi 0, %s79
      %s81 = sphi 0, %s79
      %s82 = sphi 0, %s81
      %s96 = sphi 0, %s82
      %s100 = sphi 0, %s100
      %s102 = sphi 0, %s100
      %s103 = sphi 0, %s102
      %s117 = sphi 0, %s103
      %s121 = sphi 0, %s121
      %s123 = sphi 0, %s121
      %s124 = sphi 0, %s123
      %s138 = sphi 0, %s124
      %s144 = sphi 0, %s146
      %s147 = sphi 0, %s144
      %s148 = sphi 0, %s147
      %s164 = sphi 0, %s148
      %s170 = sphi 0, %s172
      %s173 = sphi 0, %s170
      %s174 = sphi 0, %s173
      %s190 = sphi 0, %s174
      %s196 = sphi 0, %s198
      %s199 = sphi 0, %s196
      %s200 = sphi 0, %s199
      %s216 = sphi 0, %s200
      %s220 = sphi 0, %s220
      %s222 = sphi 0, %s220
      %s223 = sphi 0, %s222
      %s237 = sphi 0, %s223
    $region4: #{rnn_model_forward.1} parent=1 // loop_header_branch
      %20 = sbr.rel (%p18) target = $region8
    $region5: #{rnn_model_forward.1} parent=1 // loop_body
      %s22 = ssub.s32 %s17, 1
      %s23 = ssub.s32 %s17, 2
      %s30 = sadd.s32 1, %s25
      %p31 = scmp.ge.s32.totalorder %s30, 2
      %s32 = scalar_select %p31, 0, %s30
      %s33 = sadd.s32 1, %s24
      %s34 = scalar_select %p31, %s33, %s24
      %p35 = scmp.ge.s32.totalorder %s34, 2
      %s36 = scalar_select %p35, 0, %s34
      %s38 = sadd.s32 %s37, 1
      %p41 = scmp.eq.s32.totalorder %s17, 3
      %p42 = scmp.ne.s32.totalorder %s37, %s39
      %p43 = scmp.eq.s32.totalorder %s17, 0
      %p44 = por %p42, %p43
      %p45 = scmp.ne.s32.totalorder %s37, %s39
      %p46 = scmp.eq.s32.totalorder %s22, 3
      %p47 = por %p45, %p46
      %p48 = scmp.ne.s32.totalorder %s39, %s40
      %p49 = scmp.eq.s32.totalorder %s22, 0
      %p50 = por %p48, %p49
      %p51 = scmp.ne.s32.totalorder %s39, %s40
      %p52 = scmp.eq.s32.totalorder %s23, 3
      %p53 = por %p51, %p52
      %p55 = scmp.ne.s32.totalorder %s40, %s54
      %p56 = scmp.eq.s32.totalorder %s23, 0
      %p57 = por %p55, %p56
      %s59 = sadd.s32 %s58, 1
      %p62 = scmp.eq.s32.totalorder %s17, 3
      %p63 = scmp.ne.s32.totalorder %s58, %s60
      %p64 = scmp.eq.s32.totalorder %s17, 0
      %p65 = por %p63, %p64
      %p66 = scmp.ne.s32.totalorder %s58, %s60
      %p67 = scmp.eq.s32.totalorder %s22, 3
      %p68 = por %p66, %p67
      %p69 = scmp.ne.s32.totalorder %s60, %s61
      %p70 = scmp.eq.s32.totalorder %s22, 0
      %p71 = por %p69, %p70
      %p72 = scmp.ne.s32.totalorder %s60, %s61
      %p73 = scmp.eq.s32.totalorder %s23, 3
      %p74 = por %p72, %p73
      %p76 = scmp.ne.s32.totalorder %s61, %s75
      %p77 = scmp.eq.s32.totalorder %s23, 0
      %p78 = por %p76, %p77
      %s80 = sadd.s32 %s79, 1
      %p83 = scmp.eq.s32.totalorder %s17, 3
      %p84 = scmp.ne.s32.totalorder %s79, %s81
      %p85 = scmp.eq.s32.totalorder %s17, 0
      %p86 = por %p84, %p85
      %p87 = scmp.ne.s32.totalorder %s79, %s81
      %p88 = scmp.eq.s32.totalorder %s22, 3
      %p89 = por %p87, %p88
      %p90 = scmp.ne.s32.totalorder %s81, %s82
      %p91 = scmp.eq.s32.totalorder %s22, 0
      %p92 = por %p90, %p91
      %p93 = scmp.ne.s32.totalorder %s81, %s82
      %p94 = scmp.eq.s32.totalorder %s23, 3
      %p95 = por %p93, %p94
      %p97 = scmp.ne.s32.totalorder %s82, %s96
      %p98 = scmp.eq.s32.totalorder %s23, 0
      %p99 = por %p97, %p98
      %s101 = sadd.s32 %s100, 1
      %p104 = scmp.eq.s32.totalorder %s17, 3
      %p105 = scmp.ne.s32.totalorder %s100, %s102
      %p106 = scmp.eq.s32.totalorder %s17, 0
      %p107 = por %p105, %p106
      %p108 = scmp.ne.s32.totalorder %s100, %s102
      %p109 = scmp.eq.s32.totalorder %s22, 3
      %p110 = por %p108, %p109
      %p111 = scmp.ne.s32.totalorder %s102, %s103
      %p112 = scmp.eq.s32.totalorder %s22, 0
      %p113 = por %p111, %p112
      %p114 = scmp.ne.s32.totalorder %s102, %s103
      %p115 = scmp.eq.s32.totalorder %s23, 3
      %p116 = por %p114, %p115
      %p118 = scmp.ne.s32.totalorder %s103, %s117
      %p119 = scmp.eq.s32.totalorder %s23, 0
      %p120 = por %p118, %p119
      %s122 = sadd.s32 %s121, 1
      %p125 = scmp.eq.s32.totalorder %s17, 3
      %p126 = scmp.ne.s32.totalorder %s121, %s123
      %p127 = scmp.eq.s32.totalorder %s17, 0
      %p128 = por %p126, %p127
      %p129 = scmp.ne.s32.totalorder %s121, %s123
      %p130 = scmp.eq.s32.totalorder %s22, 3
      %p131 = por %p129, %p130
      %p132 = scmp.ne.s32.totalorder %s123, %s124
      %p133 = scmp.eq.s32.totalorder %s22, 0
      %p134 = por %p132, %p133
      %p135 = scmp.ne.s32.totalorder %s123, %s124
      %p136 = scmp.eq.s32.totalorder %s23, 3
      %p137 = por %p135, %p136
      %p139 = scmp.ne.s32.totalorder %s124, %s138
      %p140 = scmp.eq.s32.totalorder %s23, 0
      %p141 = por %p139, %p140
      %s142 = ssub.s32 %s25, %s32
      %p143 = scmp.eq.s32.totalorder %s142, 0
      %s145 = sadd.s32 %s144, 1
      %s146 = scalar_select %p143, %s144, %s145
      %p149 = pneg %p143
      %p150 = scmp.eq.s32.totalorder %s17, 3
      %p151 = por %p149, %p150
      %p152 = scmp.ne.s32.totalorder %s144, %s147
      %p153 = scmp.eq.s32.totalorder %s17, 0
      %p154 = por %p152, %p153
      %p155 = scmp.ne.s32.totalorder %s144, %s147
      %p156 = scmp.eq.s32.totalorder %s22, 3
      %p157 = por %p155, %p156
      %p158 = scmp.ne.s32.totalorder %s147, %s148
      %p159 = scmp.eq.s32.totalorder %s22, 0
      %p160 = por %p158, %p159
      %p161 = scmp.ne.s32.totalorder %s147, %s148
      %p162 = scmp.eq.s32.totalorder %s23, 3
      %p163 = por %p161, %p162
      %p165 = scmp.ne.s32.totalorder %s148, %s164
      %p166 = scmp.eq.s32.totalorder %s23, 0
      %p167 = por %p165, %p166
      %s168 = ssub.s32 %s25, %s32
      %p169 = scmp.eq.s32.totalorder %s168, 0
      %s171 = sadd.s32 %s170, 1
      %s172 = scalar_select %p169, %s170, %s171
      %p175 = pneg %p169
      %p176 = scmp.eq.s32.totalorder %s17, 3
      %p177 = por %p175, %p176
      %p178 = scmp.ne.s32.totalorder %s170, %s173
      %p179 = scmp.eq.s32.totalorder %s17, 0
      %p180 = por %p178, %p179
      %p181 = scmp.ne.s32.totalorder %s170, %s173
      %p182 = scmp.eq.s32.totalorder %s22, 3
      %p183 = por %p181, %p182
      %p184 = scmp.ne.s32.totalorder %s173, %s174
      %p185 = scmp.eq.s32.totalorder %s22, 0
      %p186 = por %p184, %p185
      %p187 = scmp.ne.s32.totalorder %s173, %s174
      %p188 = scmp.eq.s32.totalorder %s23, 3
      %p189 = por %p187, %p188
      %p191 = scmp.ne.s32.totalorder %s174, %s190
      %p192 = scmp.eq.s32.totalorder %s23, 0
      %p193 = por %p191, %p192
      %s194 = ssub.s32 %s25, %s32
      %p195 = scmp.eq.s32.totalorder %s194, 0
      %s197 = sadd.s32 %s196, 1
      %s198 = scalar_select %p195, %s196, %s197
      %p201 = pneg %p195
      %p202 = scmp.eq.s32.totalorder %s17, 3
      %p203 = por %p201, %p202
      %p204 = scmp.ne.s32.totalorder %s196, %s199
      %p205 = scmp.eq.s32.totalorder %s17, 0
      %p206 = por %p204, %p205
      %p207 = scmp.ne.s32.totalorder %s196, %s199
      %p208 = scmp.eq.s32.totalorder %s22, 3
      %p209 = por %p207, %p208
      %p210 = scmp.ne.s32.totalorder %s199, %s200
      %p211 = scmp.eq.s32.totalorder %s22, 0
      %p212 = por %p210, %p211
      %p213 = scmp.ne.s32.totalorder %s199, %s200
      %p214 = scmp.eq.s32.totalorder %s23, 3
      %p215 = por %p213, %p214
      %p217 = scmp.ne.s32.totalorder %s200, %s216
      %p218 = scmp.eq.s32.totalorder %s23, 0
      %p219 = por %p217, %p218
      %s221 = sadd.s32 %s220, 1
      %p224 = scmp.eq.s32.totalorder %s17, 3
      %p225 = scmp.ne.s32.totalorder %s220, %s222
      %p226 = scmp.eq.s32.totalorder %s17, 0
      %p227 = por %p225, %p226
      %p228 = scmp.ne.s32.totalorder %s220, %s222
      %p229 = scmp.eq.s32.totalorder %s22, 3
      %p230 = por %p228, %p229
      %p231 = scmp.ne.s32.totalorder %s222, %s223
      %p232 = scmp.eq.s32.totalorder %s22, 0
      %p233 = por %p231, %p232
      %p234 = scmp.ne.s32.totalorder %s222, %s223
      %p235 = scmp.eq.s32.totalorder %s23, 3
      %p236 = por %p234, %p235
      %p238 = scmp.ne.s32.totalorder %s223, %s237
      %p239 = scmp.eq.s32.totalorder %s23, 0
      %p240 = por %p238, %p239
      %p241 = scmp.le.s32.totalorder 1, %s17
      %p242 = scmp.lt.s32.totalorder %s17, 5
      %p243 = pnand %p241, %p242
      %p244 = pneg %p243
      // Predicated region
      $region9: #{rnn_model_forward.1} parent=5 // pred_check
        _
      $region10: #{rnn_model_forward.1} parent=5 // pred_check_branch
        %246 = sbr.rel (%p243) target = $region12
      $region11: #{rnn_model_forward.1} parent=5 // pred_region
        %s247 = ssub.s32 %s17, 1
        // Predicated region
        $region13: #{rnn_model_forward.1} parent=11 // pred_check
          %p248 = pneg %p50
        $region14: #{rnn_model_forward.1} parent=11 // pred_check_branch
          %250 = sbr.rel (%p248) target = $region16
        $region15: #{rnn_model_forward.1} parent=11 // pred_region
          _
        $region16: #{rnn_model_forward.1} parent=11 // pred_fallthru
          _
        // Predicated region
        $region17: #{rnn_model_forward.1} parent=11 // pred_check
          %p251 = pneg %p71
        $region18: #{rnn_model_forward.1} parent=11 // pred_check_branch
          %253 = sbr.rel (%p251) target = $region20
        $region19: #{rnn_model_forward.1} parent=11 // pred_region
          %s255 = ssub.s32 2048, 2048
          %256 = vsyncadd [#allocation7], %s255
          %s257 = sshll.u32 [#allocation6], 4
          %s258 = int_to_ptr.vmem [resolvable:$true] %s257
          %263 = dma.hbm_to_vmem [thread:$0]  %s1, 2048, %s258, [#allocation7], 128, 128, 8
        $region20: #{rnn_model_forward.1} parent=11 // pred_fallthru
          _
        // Predicated region
        $region21: #{rnn_model_forward.1} parent=11 // pred_check
          %p264 = pneg %p92
        $region22: #{rnn_model_forward.1} parent=11 // pred_check_branch
          %266 = sbr.rel (%p264) target = $region24
        $region23: #{rnn_model_forward.1} parent=11 // pred_region
          %s268 = ssub.s32 2048, 2048
          %269 = vsyncadd [#allocation9], %s268
          %s270 = sshll.u32 [#allocation8], 4
          %s271 = int_to_ptr.vmem [resolvable:$true] %s270
          %276 = dma.hbm_to_vmem [thread:$0]  %s2, 2048, %s271, [#allocation9], 128, 128, 8
        $region24: #{rnn_model_forward.1} parent=11 // pred_fallthru
          _
        // Predicated region
        $region25: #{rnn_model_forward.1} parent=11 // pred_check
          %p277 = pneg %p113
        $region26: #{rnn_model_forward.1} parent=11 // pred_check_branch
          %279 = sbr.rel (%p277) target = $region28
        $region27: #{rnn_model_forward.1} parent=11 // pred_region
          _
        $region28: #{rnn_model_forward.1} parent=11 // pred_fallthru
          _
        // Predicated region
        $region29: #{rnn_model_forward.1} parent=11 // pred_check
          %p280 = pneg %p134
        $region30: #{rnn_model_forward.1} parent=11 // pred_check_branch
          %282 = sbr.rel (%p280) target = $region32
        $region31: #{rnn_model_forward.1} parent=11 // pred_region
          _
        $region32: #{rnn_model_forward.1} parent=11 // pred_fallthru
          _
      $region12: #{rnn_model_forward.1} parent=5 // pred_fallthru
        _
      %p283 = scmp.lt.s32.totalorder %s17, 4
      // Predicated region
      $region33: #{rnn_model_forward.1} parent=5 // pred_check
        %p284 = pneg %p283
      $region34: #{rnn_model_forward.1} parent=5 // pred_check_branch
        %286 = sbr.rel (%p284) target = $region36
      $region35: #{rnn_model_forward.1} parent=5 // pred_region
        // Predicated region
        $region37: #{rnn_model_forward.1} parent=35 // pred_check
          %p287 = pneg %p154
        $region38: #{rnn_model_forward.1} parent=35 // pred_check_branch
          %289 = sbr.rel (%p287) target = $region40
        $region39: #{rnn_model_forward.1} parent=35 // pred_region
          %s290 = sand.u32 %s144, 1
          %s291 = sand.u32 %s144, 1
          %s292 = smul.addr %s291, 128
          %s293 = scalar_lea.vmem [#allocation10], %s292
          %s294 = smul.addr %s25, 8
          %s295 = scalar_lea.vmem %s5, %s294
          // Predicated region
          $region41: #{rnn_model_forward.1} parent=39 // pred_check
            _
          $region42: #{rnn_model_forward.1} parent=39 // pred_check_branch
            %297 = sbr.rel (0) target = $region44
          $region43: #{rnn_model_forward.1} parent=39 // pred_region
            // Predicated region
            $region45: #{rnn_model_forward.1} parent=43 // pred_check
              _
            $region46: #{rnn_model_forward.1} parent=43 // pred_check_branch
              %299 = sbr.rel (0) target = $region48
            $region47: #{rnn_model_forward.1} parent=43 // pred_region
              // Predicated region
              $region60: #{rnn_model_forward.1} parent=47 // pred_check
                _
              $region61: #{rnn_model_forward.1} parent=47 // pred_check_branch
                %345 = sbr.rel (0) target = $region63
              $region62: #{rnn_model_forward.1} parent=47 // pred_region
                loop: start=0, step=1, limit=1
                $region64: #{rnn_model_forward.1} parent=62 // loop_pre_header
                  _
                $region65: #{rnn_model_forward.1} parent=62 // loop_header
                  %s347 = sphi 0, %s351
                  %p348 = scmp.ge.s32.totalorder %s347, 1
                  %s352 = sphi %s295, %s295
                  %s353 = sphi %s293, %s293
                $region66: #{rnn_model_forward.1} parent=62 // loop_header_branch
                  %350 = sbr.rel (%p348) target = $region70
                $region67: #{rnn_model_forward.1} parent=62 // loop_body
                  %v354 = vld [vmem:[%s352] sm:$0xff]
                  %355 = vst [vmem:[%s353] sm:$0xff] %v354
                  %v356 = vld [vmem:[%s352 + $0x10] sm:$0xff]
                  %357 = vst [vmem:[%s353 + $0x8] sm:$0xff] %v356
                  %v358 = vld [vmem:[%s352 + $0x20] sm:$0xff]
                  %359 = vst [vmem:[%s353 + $0x10] sm:$0xff] %v358
                  %v360 = vld [vmem:[%s352 + $0x30] sm:$0xff]
                  %361 = vst [vmem:[%s353 + $0x18] sm:$0xff] %v360
                  %v362 = vld [vmem:[%s352 + $0x40] sm:$0xff]
                  %363 = vst [vmem:[%s353 + $0x20] sm:$0xff] %v362
                  %v364 = vld [vmem:[%s352 + $0x50] sm:$0xff]
                  %365 = vst [vmem:[%s353 + $0x28] sm:$0xff] %v364
                  %v366 = vld [vmem:[%s352 + $0x60] sm:$0xff]
                  %367 = vst [vmem:[%s353 + $0x30] sm:$0xff] %v366
                  %v368 = vld [vmem:[%s352 + $0x70] sm:$0xff]
                  %369 = vst [vmem:[%s353 + $0x38] sm:$0xff] %v368
                  %v370 = vld [vmem:[%s352 + $0x80] sm:$0xff]
                  %371 = vst [vmem:[%s353 + $0x40] sm:$0xff] %v370
                  %v372 = vld [vmem:[%s352 + $0x90] sm:$0xff]
                  %373 = vst [vmem:[%s353 + $0x48] sm:$0xff] %v372
                  %v374 = vld [vmem:[%s352 + $0xa0] sm:$0xff]
                  %375 = vst [vmem:[%s353 + $0x50] sm:$0xff] %v374
                  %v376 = vld [vmem:[%s352 + $0xb0] sm:$0xff]
                  %377 = vst [vmem:[%s353 + $0x58] sm:$0xff] %v376
                  %v378 = vld [vmem:[%s352 + $0xc0] sm:$0xff]
                  %379 = vst [vmem:[%s353 + $0x60] sm:$0xff] %v378
                  %v380 = vld [vmem:[%s352 + $0xd0] sm:$0xff]
                  %381 = vst [vmem:[%s353 + $0x68] sm:$0xff] %v380
                  %v382 = vld [vmem:[%s352 + $0xe0] sm:$0xff]
                  %383 = vst [vmem:[%s353 + $0x70] sm:$0xff] %v382
                  %v384 = vld [vmem:[%s352 + $0xf0] sm:$0xff]
                  %385 = vst [vmem:[%s353 + $0x78] sm:$0xff] %v384
                $region68: #{rnn_model_forward.1} parent=62 // loop_footer
                  %s351 = sadd.s32 1, %s347
                $region69: #{rnn_model_forward.1} parent=62 // loop_footer_branch
                  %346 = sbr.rel target = $region65
                $region70: #{rnn_model_forward.1} parent=62 // loop_exit
                  _
              $region63: #{rnn_model_forward.1} parent=47 // pred_fallthru
                _
              // Predicated region
              $region71: #{rnn_model_forward.1} parent=47 // pred_check
                _
              $region72: #{rnn_model_forward.1} parent=47 // pred_check_branch
                %387 = sbr.rel target = $region74
              $region73: #{rnn_model_forward.1} parent=47 // pred_region
                _
              $region74: #{rnn_model_forward.1} parent=47 // pred_fallthru
                _
            $region48: #{rnn_model_forward.1} parent=43 // pred_fallthru
              _
            // Predicated region
            $region49: #{rnn_model_forward.1} parent=43 // pred_check
              _
            $region50: #{rnn_model_forward.1} parent=43 // pred_check_branch
              %301 = sbr.rel target = $region52
            $region51: #{rnn_model_forward.1} parent=43 // pred_region
              %s303 = ssub.s32 256, 1
              loop: start=0, step=1, limit=1
              $region53: #{rnn_model_forward.1} parent=51 // loop_pre_header
                _
              $region54: #{rnn_model_forward.1} parent=51 // loop_header
                %s305 = sphi 0, %s309
                %p306 = scmp.ge.s32.totalorder %s305, 1
                %s310 = sphi %s295, %s295
                %s311 = sphi %s293, %s293
              $region55: #{rnn_model_forward.1} parent=51 // loop_header_branch
                %308 = sbr.rel (%p306) target = $region59
              $region56: #{rnn_model_forward.1} parent=51 // loop_body
                %v312 = vld [vmem:[%s310] sm:%s303]
                %313 = vst [vmem:[%s311] sm:%s303] %v312
                %v314 = vld [vmem:[%s310 + $0x10] sm:%s303]
                %315 = vst [vmem:[%s311 + $0x8] sm:%s303] %v314
                %v316 = vld [vmem:[%s310 + $0x20] sm:%s303]
                %317 = vst [vmem:[%s311 + $0x10] sm:%s303] %v316
                %v318 = vld [vmem:[%s310 + $0x30] sm:%s303]
                %319 = vst [vmem:[%s311 + $0x18] sm:%s303] %v318
                %v320 = vld [vmem:[%s310 + $0x40] sm:%s303]
                %321 = vst [vmem:[%s311 + $0x20] sm:%s303] %v320
                %v322 = vld [vmem:[%s310 + $0x50] sm:%s303]
                %323 = vst [vmem:[%s311 + $0x28] sm:%s303] %v322
                %v324 = vld [vmem:[%s310 + $0x60] sm:%s303]
                %325 = vst [vmem:[%s311 + $0x30] sm:%s303] %v324
                %v326 = vld [vmem:[%s310 + $0x70] sm:%s303]
                %327 = vst [vmem:[%s311 + $0x38] sm:%s303] %v326
                %v328 = vld [vmem:[%s310 + $0x80] sm:%s303]
                %329 = vst [vmem:[%s311 + $0x40] sm:%s303] %v328
                %v330 = vld [vmem:[%s310 + $0x90] sm:%s303]
                %331 = vst [vmem:[%s311 + $0x48] sm:%s303] %v330
                %v332 = vld [vmem:[%s310 + $0xa0] sm:%s303]
                %333 = vst [vmem:[%s311 + $0x50] sm:%s303] %v332
                %v334 = vld [vmem:[%s310 + $0xb0] sm:%s303]
                %335 = vst [vmem:[%s311 + $0x58] sm:%s303] %v334
                %v336 = vld [vmem:[%s310 + $0xc0] sm:%s303]
                %337 = vst [vmem:[%s311 + $0x60] sm:%s303] %v336
                %v338 = vld [vmem:[%s310 + $0xd0] sm:%s303]
                %339 = vst [vmem:[%s311 + $0x68] sm:%s303] %v338
                %v340 = vld [vmem:[%s310 + $0xe0] sm:%s303]
                %341 = vst [vmem:[%s311 + $0x70] sm:%s303] %v340
                %v342 = vld [vmem:[%s310 + $0xf0] sm:%s303]
                %343 = vst [vmem:[%s311 + $0x78] sm:%s303] %v342
              $region57: #{rnn_model_forward.1} parent=51 // loop_footer
                %s309 = sadd.s32 1, %s305
              $region58: #{rnn_model_forward.1} parent=51 // loop_footer_branch
                %304 = sbr.rel target = $region54
              $region59: #{rnn_model_forward.1} parent=51 // loop_exit
                _
            $region52: #{rnn_model_forward.1} parent=43 // pred_fallthru
              _
          $region44: #{rnn_model_forward.1} parent=39 // pred_fallthru
            _
          %388 = vnop
        $region40: #{rnn_model_forward.1} parent=35 // pred_fallthru
          _
        // Predicated region
        $region75: #{rnn_model_forward.1} parent=35 // pred_check
          %p389 = pneg %p180
        $region76: #{rnn_model_forward.1} parent=35 // pred_check_branch
          %391 = sbr.rel (%p389) target = $region78
        $region77: #{rnn_model_forward.1} parent=35 // pred_region
          %p392 = scmp.lt.s32.totalorder %s25, 1
          %s393 = scalar_select %p392, %s25, 1
          %s394 = scalar_lea.vmem %s6, %s393
        $region78: #{rnn_model_forward.1} parent=35 // pred_fallthru
          _
      $region36: #{rnn_model_forward.1} parent=5 // pred_fallthru
        _
      %p395 = scmp.le.s32.totalorder 1, %s17
      %p396 = scmp.lt.s32.totalorder %s17, 5
      %p397 = pnand %p395, %p396
      %p398 = pneg %p397
      // Predicated region
      $region79: #{rnn_model_forward.1} parent=5 // pred_check
        _
      $region80: #{rnn_model_forward.1} parent=5 // pred_check_branch
        %400 = sbr.rel (%p397) target = $region82
      $region81: #{rnn_model_forward.1} parent=5 // pred_region
        %s401 = ssub.s32 %s17, 1
        // Predicated region
        $region83: #{rnn_model_forward.1} parent=81 // pred_check
          %p402 = pneg %p71
        $region84: #{rnn_model_forward.1} parent=81 // pred_check_branch
          %404 = sbr.rel (%p402) target = $region86
        $region85: #{rnn_model_forward.1} parent=81 // pred_region
          %405 = dma.done [#allocation7], 2048
        $region86: #{rnn_model_forward.1} parent=81 // pred_fallthru
          _
        // Predicated region
        $region87: #{rnn_model_forward.1} parent=81 // pred_check
          %p406 = pneg %p92
        $region88: #{rnn_model_forward.1} parent=81 // pred_check_branch
          %408 = sbr.rel (%p406) target = $region90
        $region89: #{rnn_model_forward.1} parent=81 // pred_region
          %409 = dma.done [#allocation9], 2048
        $region90: #{rnn_model_forward.1} parent=81 // pred_fallthru
          _
        %s410 = sand.u32 %s147, 1
        %s411 = sand.u32 %s147, 1
        %s412 = smul.addr %s411, 128
        %s413 = scalar_lea.vmem [#allocation10], %s412
        // Predicated region
        $region91: #{rnn_model_forward.1} parent=81 // pred_check
          %p414 = pneg %p160
        $region92: #{rnn_model_forward.1} parent=81 // pred_check_branch
          %416 = sbr.rel (%p414) target = $region94
        $region93: #{rnn_model_forward.1} parent=81 // pred_region
          _
        $region94: #{rnn_model_forward.1} parent=81 // pred_fallthru
          _
        %p417 = pneg %p50
        %p418 = pneg %p47
        %p419 = pneg %p71
        %p420 = pneg %p68
        %p421 = pneg %p92
        %p422 = pneg %p89
        %p423 = pneg %p113
        %p424 = pneg %p110
        %p425 = pneg %p134
        %p426 = pneg %p131
        %s427 = sand.u32 %s147, 1
        %s428 = sand.u32 %s147, 1
        %s429 = smul.addr %s428, 128
        %s430 = scalar_lea.vmem [#allocation10], %s429
        %p431 = pneg %p160
        %p432 = pneg %p157
        %p433 = scmp.lt.s32.totalorder %s27, 1
        %s434 = scalar_select %p433, %s27, 1
        %s435 = scalar_lea.vmem %s6, %s434
        %p436 = pneg %p186
        %p437 = pneg %p183
        %p438 = pneg %p212
        %p439 = pneg %p209
        %s440 = sand.u32 %s199, 1
        %s441 = sand.u32 %s199, 1
        %s442 = smul.addr %s441, 64
        %s443 = scalar_lea.vmem [#allocation11], %s442
        %p444 = pneg %p233
        %p445 = pneg %p230
        %p446 = scmp.lt.s32.totalorder %s27, 1
        %s447 = scalar_select %p446, %s27, 1
        %s448 = scalar_lea.vmem %s6, %s447
        %p449 = scmp.eq.s32.totalorder %s26, 0
        %p450 = scmp.eq.s32.totalorder %s27, 0
        %p451 = pnand %p449, %p450
        %p452 = pneg %p451
        // Predicated region
        $region95: #{rnn_model_forward.1} parent=81 // pred_check
          _
        $region96: #{rnn_model_forward.1} parent=81 // pred_check_branch
          %454 = sbr.rel (%p451) target = $region98
        $region97: #{rnn_model_forward.1} parent=81 // pred_region
          %v455 = vld [vmem:[%s0] sm:$0xff]
          %v456 = vld [vmem:[%s0 + $0x8] sm:$0xff]
          %v457 = vld [vmem:[%s0 + $0x10] sm:$0xff]
          %v458 = vld [vmem:[%s0 + $0x18] sm:$0xff]
          %v459 = vld [vmem:[%s0 + $0x20] sm:$0xff]
          %v460 = vld [vmem:[%s0 + $0x28] sm:$0xff]
          %v461 = vld [vmem:[%s0 + $0x30] sm:$0xff]
          %v462 = vld [vmem:[%s0 + $0x38] sm:$0xff]
          %v463 = vld [vmem:[#allocation6] sm:$0xff]
          %v464 = vld [vmem:[#allocation6 + $0x8] sm:$0xff]
          %v465 = vld [vmem:[#allocation6 + $0x10] sm:$0xff]
          %v466 = vld [vmem:[#allocation6 + $0x18] sm:$0xff]
          %v467 = vld [vmem:[#allocation6 + $0x20] sm:$0xff]
          %v468 = vld [vmem:[#allocation6 + $0x28] sm:$0xff]
          %v469 = vld [vmem:[#allocation6 + $0x30] sm:$0xff]
          %v470 = vld [vmem:[#allocation6 + $0x38] sm:$0xff]
          %v471 = vld [vmem:[#allocation6 + $0x40] sm:$0xff]
          %v472 = vld [vmem:[#allocation6 + $0x48] sm:$0xff]
          %v473 = vld [vmem:[#allocation6 + $0x50] sm:$0xff]
          %v474 = vld [vmem:[#allocation6 + $0x58] sm:$0xff]
          %v475 = vld [vmem:[#allocation6 + $0x60] sm:$0xff]
          %v476 = vld [vmem:[#allocation6 + $0x68] sm:$0xff]
          %v477 = vld [vmem:[#allocation6 + $0x70] sm:$0xff]
          %v478 = vld [vmem:[#allocation6 + $0x78] sm:$0xff]
          %v479 = vld [vmem:[%s3] sm:$0x1]
          %v481 = vlaneseq
          %v482 = vshrl.u32 %v481, 7
          %v483 = vsub.s32 0, %v482
          %v484 = vrot.slane %v479, %v483
          %486 = vmatprep.subr.mxu0 0.0
          %487 = vmatpush1.msra.mxu0 %v478
          %488 = vmatprep.subr.mxu0 0.0
          %489 = vmatpush1.msra.mxu0 %v477
          %490 = vmatprep.subr.mxu0 0.0
          %491 = vmatpush1.msra.mxu0 %v476
          %492 = vmatprep.subr.mxu0 0.0
          %493 = vmatpush1.msra.mxu0 %v475
          %494 = vmatprep.subr.mxu0 0.0
          %495 = vmatpush1.msra.mxu0 %v474
          %496 = vmatprep.subr.mxu0 0.0
          %497 = vmatpush1.msra.mxu0 %v473
          %498 = vmatprep.subr.mxu0 0.0
          %499 = vmatpush1.msra.mxu0 %v472
          %500 = vmatprep.subr.mxu0 0.0
          %501 = vmatpush1.msra.mxu0 %v471
          %502 = vmatprep.subr.mxu0 0.0
          %503 = vmatpush1.msra.mxu0 %v470
          %504 = vmatprep.subr.mxu0 0.0
          %505 = vmatpush1.msra.mxu0 %v469
          %506 = vmatprep.subr.mxu0 0.0
          %507 = vmatpush1.msra.mxu0 %v468
          %508 = vmatprep.subr.mxu0 0.0
          %509 = vmatpush1.msra.mxu0 %v467
          %510 = vmatprep.subr.mxu0 0.0
          %511 = vmatpush1.msra.mxu0 %v466
          %512 = vmatprep.subr.mxu0 0.0
          %513 = vmatpush1.msra.mxu0 %v465
          %514 = vmatprep.subr.mxu0 0.0
          %515 = vmatpush1.msra.mxu0 %v464
          %516 = vmatprep.subr.mxu0 0.0
          %517 = vmatpush1.msra.mxu0 %v463
          %518 = vmatprep.subr.mxu0 0.0
          %519 = vmatpush2.msra.mxu0 0.0
          %520 = vmatprep.subr.mxu0 0.0
          %521 = vmatpush2.msra.mxu0 0.0
          %522 = vmatprep.subr.mxu0 0.0
          %523 = vmatpush2.msra.mxu0 0.0
          %524 = vmatprep.subr.mxu0 0.0
          %525 = vmatpush2.msra.mxu0 0.0
          %526 = vmatprep.subr.mxu0 0.0
          %527 = vmatpush2.msra.mxu0 0.0
          %528 = vmatprep.subr.mxu0 0.0
          %529 = vmatpush2.msra.mxu0 0.0
          %530 = vmatprep.subr.mxu0 0.0
          %531 = vmatpush2.msra.mxu0 0.0
          %532 = vmatprep.subr.mxu0 0.0
          %533 = vmatpush2.msra.mxu0 0.0
          %534 = vmatprep.subr.mxu0 0.0
          %535 = vmatpush2.msra.mxu0 0.0
          %536 = vmatprep.subr.mxu0 0.0
          %537 = vmatpush2.msra.mxu0 0.0
          %538 = vmatprep.subr.mxu0 0.0
          %539 = vmatpush2.msra.mxu0 0.0
          %540 = vmatprep.subr.mxu0 0.0
          %541 = vmatpush2.msra.mxu0 0.0
          %542 = vmatprep.subr.mxu0 0.0
          %543 = vmatpush2.msra.mxu0 0.0
          %544 = vmatprep.subr.mxu0 0.0
          %545 = vmatpush2.msra.mxu0 0.0
          %546 = vmatprep.subr.mxu0 0.0
          %547 = vmatpush2.msra.mxu0 0.0
          %548 = vmatprep.subr.mxu0 0.0
          %549 = vmatpush2.msra.mxu0 0.0
          %550 = vmatprep.mubr.f32.mxu0 0.0
          %551 = vmatmul.mubr.f32.gmra.mxu0 %v455
          %v552 = vpop.f32.mrf.mxu0
          %v553 = vadd.f32 %v484, %v552
          %v554 = vpop.f32.mrf.mxu0
          %555 = vmatprep.mubr.f32.mxu0 0.0
          %556 = vmatmul.mubr.f32.gmra.mxu0 %v456
          %v557 = vpop.f32.mrf.mxu0
          %v558 = vadd.f32 %v484, %v557
          %v559 = vpop.f32.mrf.mxu0
          %560 = vmatprep.mubr.f32.mxu0 0.0
          %561 = vmatmul.mubr.f32.gmra.mxu0 %v457
          %v562 = vpop.f32.mrf.mxu0
          %v563 = vadd.f32 %v484, %v562
          %v564 = vpop.f32.mrf.mxu0
          %565 = vmatprep.mubr.f32.mxu0 0.0
          %566 = vmatmul.mubr.f32.gmra.mxu0 %v458
          %v567 = vpop.f32.mrf.mxu0
          %v568 = vadd.f32 %v484, %v567
          %v569 = vpop.f32.mrf.mxu0
          %570 = vmatprep.mubr.f32.mxu0 0.0
          %571 = vmatmul.mubr.f32.gmra.mxu0 %v459
          %v572 = vpop.f32.mrf.mxu0
          %v573 = vadd.f32 %v484, %v572
          %v574 = vpop.f32.mrf.mxu0
          %575 = vmatprep.mubr.f32.mxu0 0.0
          %576 = vmatmul.mubr.f32.gmra.mxu0 %v460
          %v577 = vpop.f32.mrf.mxu0
          %v578 = vadd.f32 %v484, %v577
          %v579 = vpop.f32.mrf.mxu0
          %580 = vmatprep.mubr.f32.mxu0 0.0
          %581 = vmatmul.mubr.f32.gmra.mxu0 %v461
          %v582 = vpop.f32.mrf.mxu0
          %v583 = vadd.f32 %v484, %v582
          %v584 = vpop.f32.mrf.mxu0
          %585 = vmatprep.mubr.f32.mxu0 0.0
          %586 = vmatmul.mubr.f32.gmra.mxu0 %v462
          %v587 = vpop.f32.mrf.mxu0
          %v588 = vadd.f32 %v484, %v587
          %v589 = vpop.f32.mrf.mxu0
          %590 = vdwg.mxu0
          %591 = vst [vmem:[#allocation3] sm:$0xff] %v553
          %592 = vst [vmem:[#allocation3 + $0x8] sm:$0xff] %v558
          %593 = vst [vmem:[#allocation3 + $0x10] sm:$0xff] %v563
          %594 = vst [vmem:[#allocation3 + $0x18] sm:$0xff] %v568
          %595 = vst [vmem:[#allocation3 + $0x20] sm:$0xff] %v573
          %596 = vst [vmem:[#allocation3 + $0x28] sm:$0xff] %v578
          %597 = vst [vmem:[#allocation3 + $0x30] sm:$0xff] %v583
          %598 = vst [vmem:[#allocation3 + $0x38] sm:$0xff] %v588
          %v599 = vld [vmem:[%s4] sm:$0xff]
          %600 = vst [vmem:[#allocation2] sm:$0xff] %v599
          %v601 = vld [vmem:[#allocation3] sm:$0xff]
          %v602 = vld [vmem:[#allocation2] sm:$0xff]
          %v603 = vld [vmem:[#allocation8] sm:$0xff]
          %v604 = vld [vmem:[#allocation8 + $0x8] sm:$0xff]
          %v605 = vld [vmem:[#allocation8 + $0x10] sm:$0xff]
          %v606 = vld [vmem:[#allocation8 + $0x18] sm:$0xff]
          %v607 = vld [vmem:[#allocation8 + $0x20] sm:$0xff]
          %v608 = vld [vmem:[#allocation8 + $0x28] sm:$0xff]
          %v609 = vld [vmem:[#allocation8 + $0x30] sm:$0xff]
          %v610 = vld [vmem:[#allocation8 + $0x38] sm:$0xff]
          %v611 = vld [vmem:[#allocation8 + $0x40] sm:$0xff]
          %v612 = vld [vmem:[#allocation8 + $0x48] sm:$0xff]
          %v613 = vld [vmem:[#allocation8 + $0x50] sm:$0xff]
          %v614 = vld [vmem:[#allocation8 + $0x58] sm:$0xff]
          %v615 = vld [vmem:[#allocation8 + $0x60] sm:$0xff]
          %v616 = vld [vmem:[#allocation8 + $0x68] sm:$0xff]
          %v617 = vld [vmem:[#allocation8 + $0x70] sm:$0xff]
          %v618 = vld [vmem:[#allocation8 + $0x78] sm:$0xff]
          %619 = vmatprep.subr.mxu0 0.0
          %620 = vmatpush1.msra.mxu0 %v618
          %621 = vmatprep.subr.mxu0 0.0
          %622 = vmatpush1.msra.mxu0 %v617
          %623 = vmatprep.subr.mxu0 0.0
          %624 = vmatpush1.msra.mxu0 %v616
          %625 = vmatprep.subr.mxu0 0.0
          %626 = vmatpush1.msra.mxu0 %v615
          %627 = vmatprep.subr.mxu0 0.0
          %628 = vmatpush1.msra.mxu0 %v614
          %629 = vmatprep.subr.mxu0 0.0
          %630 = vmatpush1.msra.mxu0 %v613
          %631 = vmatprep.subr.mxu0 0.0
          %632 = vmatpush1.msra.mxu0 %v612
          %633 = vmatprep.subr.mxu0 0.0
          %634 = vmatpush1.msra.mxu0 %v611
          %635 = vmatprep.subr.mxu0 0.0
          %636 = vmatpush1.msra.mxu0 %v610
          %637 = vmatprep.subr.mxu0 0.0
          %638 = vmatpush1.msra.mxu0 %v609
          %639 = vmatprep.subr.mxu0 0.0
          %640 = vmatpush1.msra.mxu0 %v608
          %641 = vmatprep.subr.mxu0 0.0
          %642 = vmatpush1.msra.mxu0 %v607
          %643 = vmatprep.subr.mxu0 0.0
          %644 = vmatpush1.msra.mxu0 %v606
          %645 = vmatprep.subr.mxu0 0.0
          %646 = vmatpush1.msra.mxu0 %v605
          %647 = vmatprep.subr.mxu0 0.0
          %648 = vmatpush1.msra.mxu0 %v604
          %649 = vmatprep.subr.mxu0 0.0
          %650 = vmatpush1.msra.mxu0 %v603
          %651 = vmatprep.subr.mxu0 0.0
          %652 = vmatpush2.msra.mxu0 0.0
          %653 = vmatprep.subr.mxu0 0.0
          %654 = vmatpush2.msra.mxu0 0.0
          %655 = vmatprep.subr.mxu0 0.0
          %656 = vmatpush2.msra.mxu0 0.0
          %657 = vmatprep.subr.mxu0 0.0
          %658 = vmatpush2.msra.mxu0 0.0
          %659 = vmatprep.subr.mxu0 0.0
          %660 = vmatpush2.msra.mxu0 0.0
          %661 = vmatprep.subr.mxu0 0.0
          %662 = vmatpush2.msra.mxu0 0.0
          %663 = vmatprep.subr.mxu0 0.0
          %664 = vmatpush2.msra.mxu0 0.0
          %665 = vmatprep.subr.mxu0 0.0
          %666 = vmatpush2.msra.mxu0 0.0
          %667 = vmatprep.subr.mxu0 0.0
          %668 = vmatpush2.msra.mxu0 0.0
          %669 = vmatprep.subr.mxu0 0.0
          %670 = vmatpush2.msra.mxu0 0.0
          %671 = vmatprep.subr.mxu0 0.0
          %672 = vmatpush2.msra.mxu0 0.0
          %673 = vmatprep.subr.mxu0 0.0
          %674 = vmatpush2.msra.mxu0 0.0
          %675 = vmatprep.subr.mxu0 0.0
          %676 = vmatpush2.msra.mxu0 0.0
          %677 = vmatprep.subr.mxu0 0.0
          %678 = vmatpush2.msra.mxu0 0.0
          %679 = vmatprep.subr.mxu0 0.0
          %680 = vmatpush2.msra.mxu0 0.0
          %681 = vmatprep.subr.mxu0 0.0
          %682 = vmatpush2.msra.mxu0 0.0
          %683 = vmatprep.mubr.f32.mxu0 0.0
          %684 = vmatmul.mubr.f32.gmra.mxu0 %v602
          %v685 = vpop.f32.mrf.mxu0
          %v686 = vadd.f32 0.0, %v685
          %v687 = vpop.f32.mrf.mxu0
          %688 = vdwg.mxu0
          %v689 = vadd.f32 %v601, %v686
          %v690 = vtanh.pop %v689
          %691 = vst [vmem:[#allocation2] sm:$0xff] %v690
          %692 = vst [vmem:[#allocation3] sm:$0xff] %v690
          %s693 = scalar_lea.vmem [#allocation3], 8
          %v694 = vld [vmem:[%s693] sm:$0xff]
          %v695 = vld [vmem:[#allocation2] sm:$0xff]
          %v696 = vld [vmem:[#allocation8] sm:$0xff]
          %v697 = vld [vmem:[#allocation8 + $0x8] sm:$0xff]
          %v698 = vld [vmem:[#allocation8 + $0x10] sm:$0xff]
          %v699 = vld [vmem:[#allocation8 + $0x18] sm:$0xff]
          %v700 = vld [vmem:[#allocation8 + $0x20] sm:$0xff]
          %v701 = vld [vmem:[#allocation8 + $0x28] sm:$0xff]
          %v702 = vld [vmem:[#allocation8 + $0x30] sm:$0xff]
          %v703 = vld [vmem:[#allocation8 + $0x38] sm:$0xff]
          %v704 = vld [vmem:[#allocation8 + $0x40] sm:$0xff]
          %v705 = vld [vmem:[#allocation8 + $0x48] sm:$0xff]
          %v706 = vld [vmem:[#allocation8 + $0x50] sm:$0xff]
          %v707 = vld [vmem:[#allocation8 + $0x58] sm:$0xff]
          %v708 = vld [vmem:[#allocation8 + $0x60] sm:$0xff]
          %v709 = vld [vmem:[#allocation8 + $0x68] sm:$0xff]
          %v710 = vld [vmem:[#allocation8 + $0x70] sm:$0xff]
          %v711 = vld [vmem:[#allocation8 + $0x78] sm:$0xff]
          %712 = vmatprep.subr.mxu0 0.0
          %713 = vmatpush1.msra.mxu0 %v711
          %714 = vmatprep.subr.mxu0 0.0
          %715 = vmatpush1.msra.mxu0 %v710
          %716 = vmatprep.subr.mxu0 0.0
          %717 = vmatpush1.msra.mxu0 %v709
          %718 = vmatprep.subr.mxu0 0.0
          %719 = vmatpush1.msra.mxu0 %v708
          %720 = vmatprep.subr.mxu0 0.0
          %721 = vmatpush1.msra.mxu0 %v707
          %722 = vmatprep.subr.mxu0 0.0
          %723 = vmatpush1.msra.mxu0 %v706
          %724 = vmatprep.subr.mxu0 0.0
          %725 = vmatpush1.msra.mxu0 %v705
          %726 = vmatprep.subr.mxu0 0.0
          %727 = vmatpush1.msra.mxu0 %v704
          %728 = vmatprep.subr.mxu0 0.0
          %729 = vmatpush1.msra.mxu0 %v703
          %730 = vmatprep.subr.mxu0 0.0
          %731 = vmatpush1.msra.mxu0 %v702
          %732 = vmatprep.subr.mxu0 0.0
          %733 = vmatpush1.msra.mxu0 %v701
          %734 = vmatprep.subr.mxu0 0.0
          %735 = vmatpush1.msra.mxu0 %v700
          %736 = vmatprep.subr.mxu0 0.0
          %737 = vmatpush1.msra.mxu0 %v699
          %738 = vmatprep.subr.mxu0 0.0
          %739 = vmatpush1.msra.mxu0 %v698
          %740 = vmatprep.subr.mxu0 0.0
          %741 = vmatpush1.msra.mxu0 %v697
          %742 = vmatprep.subr.mxu0 0.0
          %743 = vmatpush1.msra.mxu0 %v696
          %744 = vmatprep.subr.mxu0 0.0
          %745 = vmatpush2.msra.mxu0 0.0
          %746 = vmatprep.subr.mxu0 0.0
          %747 = vmatpush2.msra.mxu0 0.0
          %748 = vmatprep.subr.mxu0 0.0
          %749 = vmatpush2.msra.mxu0 0.0
          %750 = vmatprep.subr.mxu0 0.0
          %751 = vmatpush2.msra.mxu0 0.0
          %752 = vmatprep.subr.mxu0 0.0
          %753 = vmatpush2.msra.mxu0 0.0
          %754 = vmatprep.subr.mxu0 0.0
          %755 = vmatpush2.msra.mxu0 0.0
          %756 = vmatprep.subr.mxu0 0.0
          %757 = vmatpush2.msra.mxu0 0.0
          %758 = vmatprep.subr.mxu0 0.0
          %759 = vmatpush2.msra.mxu0 0.0
          %760 = vmatprep.subr.mxu0 0.0
          %761 = vmatpush2.msra.mxu0 0.0
          %762 = vmatprep.subr.mxu0 0.0
          %763 = vmatpush2.msra.mxu0 0.0
          %764 = vmatprep.subr.mxu0 0.0
          %765 = vmatpush2.msra.mxu0 0.0
          %766 = vmatprep.subr.mxu0 0.0
          %767 = vmatpush2.msra.mxu0 0.0
          %768 = vmatprep.subr.mxu0 0.0
          %769 = vmatpush2.msra.mxu0 0.0
          %770 = vmatprep.subr.mxu0 0.0
          %771 = vmatpush2.msra.mxu0 0.0
          %772 = vmatprep.subr.mxu0 0.0
          %773 = vmatpush2.msra.mxu0 0.0
          %774 = vmatprep.subr.mxu0 0.0
          %775 = vmatpush2.msra.mxu0 0.0
          %776 = vmatprep.mubr.f32.mxu0 0.0
          %777 = vmatmul.mubr.f32.gmra.mxu0 %v695
          %v778 = vpop.f32.mrf.mxu0
          %v779 = vadd.f32 0.0, %v778
          %v780 = vpop.f32.mrf.mxu0
          %781 = vdwg.mxu0
          %v782 = vadd.f32 %v694, %v779
          %v783 = vtanh.pop %v782
          %784 = vst [vmem:[#allocation2] sm:$0xff] %v783
          %785 = vst [vmem:[%s693] sm:$0xff] %v783
          %s786 = scalar_lea.vmem [#allocation3], 16
          %v787 = vld [vmem:[%s786] sm:$0xff]
          %v788 = vld [vmem:[#allocation2] sm:$0xff]
          %v789 = vld [vmem:[#allocation8] sm:$0xff]
          %v790 = vld [vmem:[#allocation8 + $0x8] sm:$0xff]
          %v791 = vld [vmem:[#allocation8 + $0x10] sm:$0xff]
          %v792 = vld [vmem:[#allocation8 + $0x18] sm:$0xff]
          %v793 = vld [vmem:[#allocation8 + $0x20] sm:$0xff]
          %v794 = vld [vmem:[#allocation8 + $0x28] sm:$0xff]
          %v795 = vld [vmem:[#allocation8 + $0x30] sm:$0xff]
          %v796 = vld [vmem:[#allocation8 + $0x38] sm:$0xff]
          %v797 = vld [vmem:[#allocation8 + $0x40] sm:$0xff]
          %v798 = vld [vmem:[#allocation8 + $0x48] sm:$0xff]
          %v799 = vld [vmem:[#allocation8 + $0x50] sm:$0xff]
          %v800 = vld [vmem:[#allocation8 + $0x58] sm:$0xff]
          %v801 = vld [vmem:[#allocation8 + $0x60] sm:$0xff]
          %v802 = vld [vmem:[#allocation8 + $0x68] sm:$0xff]
          %v803 = vld [vmem:[#allocation8 + $0x70] sm:$0xff]
          %v804 = vld [vmem:[#allocation8 + $0x78] sm:$0xff]
          %805 = vmatprep.subr.mxu0 0.0
          %806 = vmatpush1.msra.mxu0 %v804
          %807 = vmatprep.subr.mxu0 0.0
          %808 = vmatpush1.msra.mxu0 %v803
          %809 = vmatprep.subr.mxu0 0.0
          %810 = vmatpush1.msra.mxu0 %v802
          %811 = vmatprep.subr.mxu0 0.0
          %812 = vmatpush1.msra.mxu0 %v801
          %813 = vmatprep.subr.mxu0 0.0
          %814 = vmatpush1.msra.mxu0 %v800
          %815 = vmatprep.subr.mxu0 0.0
          %816 = vmatpush1.msra.mxu0 %v799
          %817 = vmatprep.subr.mxu0 0.0
          %818 = vmatpush1.msra.mxu0 %v798
          %819 = vmatprep.subr.mxu0 0.0
          %820 = vmatpush1.msra.mxu0 %v797
          %821 = vmatprep.subr.mxu0 0.0
          %822 = vmatpush1.msra.mxu0 %v796
          %823 = vmatprep.subr.mxu0 0.0
          %824 = vmatpush1.msra.mxu0 %v795
          %825 = vmatprep.subr.mxu0 0.0
          %826 = vmatpush1.msra.mxu0 %v794
          %827 = vmatprep.subr.mxu0 0.0
          %828 = vmatpush1.msra.mxu0 %v793
          %829 = vmatprep.subr.mxu0 0.0
          %830 = vmatpush1.msra.mxu0 %v792
          %831 = vmatprep.subr.mxu0 0.0
          %832 = vmatpush1.msra.mxu0 %v791
          %833 = vmatprep.subr.mxu0 0.0
          %834 = vmatpush1.msra.mxu0 %v790
          %835 = vmatprep.subr.mxu0 0.0
          %836 = vmatpush1.msra.mxu0 %v789
          %837 = vmatprep.subr.mxu0 0.0
          %838 = vmatpush2.msra.mxu0 0.0
          %839 = vmatprep.subr.mxu0 0.0
          %840 = vmatpush2.msra.mxu0 0.0
          %841 = vmatprep.subr.mxu0 0.0
          %842 = vmatpush2.msra.mxu0 0.0
          %843 = vmatprep.subr.mxu0 0.0
          %844 = vmatpush2.msra.mxu0 0.0
          %845 = vmatprep.subr.mxu0 0.0
          %846 = vmatpush2.msra.mxu0 0.0
          %847 = vmatprep.subr.mxu0 0.0
          %848 = vmatpush2.msra.mxu0 0.0
          %849 = vmatprep.subr.mxu0 0.0
          %850 = vmatpush2.msra.mxu0 0.0
          %851 = vmatprep.subr.mxu0 0.0
          %852 = vmatpush2.msra.mxu0 0.0
          %853 = vmatprep.subr.mxu0 0.0
          %854 = vmatpush2.msra.mxu0 0.0
          %855 = vmatprep.subr.mxu0 0.0
          %856 = vmatpush2.msra.mxu0 0.0
          %857 = vmatprep.subr.mxu0 0.0
          %858 = vmatpush2.msra.mxu0 0.0
          %859 = vmatprep.subr.mxu0 0.0
          %860 = vmatpush2.msra.mxu0 0.0
          %861 = vmatprep.subr.mxu0 0.0
          %862 = vmatpush2.msra.mxu0 0.0
          %863 = vmatprep.subr.mxu0 0.0
          %864 = vmatpush2.msra.mxu0 0.0
          %865 = vmatprep.subr.mxu0 0.0
          %866 = vmatpush2.msra.mxu0 0.0
          %867 = vmatprep.subr.mxu0 0.0
          %868 = vmatpush2.msra.mxu0 0.0
          %869 = vmatprep.mubr.f32.mxu0 0.0
          %870 = vmatmul.mubr.f32.gmra.mxu0 %v788
          %v871 = vpop.f32.mrf.mxu0
          %v872 = vadd.f32 0.0, %v871
          %v873 = vpop.f32.mrf.mxu0
          %874 = vdwg.mxu0
          %v875 = vadd.f32 %v787, %v872
          %v876 = vtanh.pop %v875
          %877 = vst [vmem:[#allocation2] sm:$0xff] %v876
          %878 = vst [vmem:[%s786] sm:$0xff] %v876
          %s879 = scalar_lea.vmem [#allocation3], 24
          %v880 = vld [vmem:[%s879] sm:$0xff]
          %v881 = vld [vmem:[#allocation2] sm:$0xff]
          %v882 = vld [vmem:[#allocation8] sm:$0xff]
          %v883 = vld [vmem:[#allocation8 + $0x8] sm:$0xff]
          %v884 = vld [vmem:[#allocation8 + $0x10] sm:$0xff]
          %v885 = vld [vmem:[#allocation8 + $0x18] sm:$0xff]
          %v886 = vld [vmem:[#allocation8 + $0x20] sm:$0xff]
          %v887 = vld [vmem:[#allocation8 + $0x28] sm:$0xff]
          %v888 = vld [vmem:[#allocation8 + $0x30] sm:$0xff]
          %v889 = vld [vmem:[#allocation8 + $0x38] sm:$0xff]
          %v890 = vld [vmem:[#allocation8 + $0x40] sm:$0xff]
          %v891 = vld [vmem:[#allocation8 + $0x48] sm:$0xff]
          %v892 = vld [vmem:[#allocation8 + $0x50] sm:$0xff]
          %v893 = vld [vmem:[#allocation8 + $0x58] sm:$0xff]
          %v894 = vld [vmem:[#allocation8 + $0x60] sm:$0xff]
          %v895 = vld [vmem:[#allocation8 + $0x68] sm:$0xff]
          %v896 = vld [vmem:[#allocation8 + $0x70] sm:$0xff]
          %v897 = vld [vmem:[#allocation8 + $0x78] sm:$0xff]
          %898 = vmatprep.subr.mxu0 0.0
          %899 = vmatpush1.msra.mxu0 %v897
          %900 = vmatprep.subr.mxu0 0.0
          %901 = vmatpush1.msra.mxu0 %v896
          %902 = vmatprep.subr.mxu0 0.0
          %903 = vmatpush1.msra.mxu0 %v895
          %904 = vmatprep.subr.mxu0 0.0
          %905 = vmatpush1.msra.mxu0 %v894
          %906 = vmatprep.subr.mxu0 0.0
          %907 = vmatpush1.msra.mxu0 %v893
          %908 = vmatprep.subr.mxu0 0.0
          %909 = vmatpush1.msra.mxu0 %v892
          %910 = vmatprep.subr.mxu0 0.0
          %911 = vmatpush1.msra.mxu0 %v891
          %912 = vmatprep.subr.mxu0 0.0
          %913 = vmatpush1.msra.mxu0 %v890
          %914 = vmatprep.subr.mxu0 0.0
          %915 = vmatpush1.msra.mxu0 %v889
          %916 = vmatprep.subr.mxu0 0.0
          %917 = vmatpush1.msra.mxu0 %v888
          %918 = vmatprep.subr.mxu0 0.0
          %919 = vmatpush1.msra.mxu0 %v887
          %920 = vmatprep.subr.mxu0 0.0
          %921 = vmatpush1.msra.mxu0 %v886
          %922 = vmatprep.subr.mxu0 0.0
          %923 = vmatpush1.msra.mxu0 %v885
          %924 = vmatprep.subr.mxu0 0.0
          %925 = vmatpush1.msra.mxu0 %v884
          %926 = vmatprep.subr.mxu0 0.0
          %927 = vmatpush1.msra.mxu0 %v883
          %928 = vmatprep.subr.mxu0 0.0
          %929 = vmatpush1.msra.mxu0 %v882
          %930 = vmatprep.subr.mxu0 0.0
          %931 = vmatpush2.msra.mxu0 0.0
          %932 = vmatprep.subr.mxu0 0.0
          %933 = vmatpush2.msra.mxu0 0.0
          %934 = vmatprep.subr.mxu0 0.0
          %935 = vmatpush2.msra.mxu0 0.0
          %936 = vmatprep.subr.mxu0 0.0
          %937 = vmatpush2.msra.mxu0 0.0
          %938 = vmatprep.subr.mxu0 0.0
          %939 = vmatpush2.msra.mxu0 0.0
          %940 = vmatprep.subr.mxu0 0.0
          %941 = vmatpush2.msra.mxu0 0.0
          %942 = vmatprep.subr.mxu0 0.0
          %943 = vmatpush2.msra.mxu0 0.0
          %944 = vmatprep.subr.mxu0 0.0
          %945 = vmatpush2.msra.mxu0 0.0
          %946 = vmatprep.subr.mxu0 0.0
          %947 = vmatpush2.msra.mxu0 0.0
          %948 = vmatprep.subr.mxu0 0.0
          %949 = vmatpush2.msra.mxu0 0.0
          %950 = vmatprep.subr.mxu0 0.0
          %951 = vmatpush2.msra.mxu0 0.0
          %952 = vmatprep.subr.mxu0 0.0
          %953 = vmatpush2.msra.mxu0 0.0
          %954 = vmatprep.subr.mxu0 0.0
          %955 = vmatpush2.msra.mxu0 0.0
          %956 = vmatprep.subr.mxu0 0.0
          %957 = vmatpush2.msra.mxu0 0.0
          %958 = vmatprep.subr.mxu0 0.0
          %959 = vmatpush2.msra.mxu0 0.0
          %960 = vmatprep.subr.mxu0 0.0
          %961 = vmatpush2.msra.mxu0 0.0
          %962 = vmatprep.mubr.f32.mxu0 0.0
          %963 = vmatmul.mubr.f32.gmra.mxu0 %v881
          %v964 = vpop.f32.mrf.mxu0
          %v965 = vadd.f32 0.0, %v964
          %v966 = vpop.f32.mrf.mxu0
          %967 = vdwg.mxu0
          %v968 = vadd.f32 %v880, %v965
          %v969 = vtanh.pop %v968
          %970 = vst [vmem:[#allocation2] sm:$0xff] %v969
          %971 = vst [vmem:[%s879] sm:$0xff] %v969
          %s972 = scalar_lea.vmem [#allocation3], 32
          %v973 = vld [vmem:[%s972] sm:$0xff]
          %v974 = vld [vmem:[#allocation2] sm:$0xff]
          %v975 = vld [vmem:[#allocation8] sm:$0xff]
          %v976 = vld [vmem:[#allocation8 + $0x8] sm:$0xff]
          %v977 = vld [vmem:[#allocation8 + $0x10] sm:$0xff]
          %v978 = vld [vmem:[#allocation8 + $0x18] sm:$0xff]
          %v979 = vld [vmem:[#allocation8 + $0x20] sm:$0xff]
          %v980 = vld [vmem:[#allocation8 + $0x28] sm:$0xff]
          %v981 = vld [vmem:[#allocation8 + $0x30] sm:$0xff]
          %v982 = vld [vmem:[#allocation8 + $0x38] sm:$0xff]
          %v983 = vld [vmem:[#allocation8 + $0x40] sm:$0xff]
          %v984 = vld [vmem:[#allocation8 + $0x48] sm:$0xff]
          %v985 = vld [vmem:[#allocation8 + $0x50] sm:$0xff]
          %v986 = vld [vmem:[#allocation8 + $0x58] sm:$0xff]
          %v987 = vld [vmem:[#allocation8 + $0x60] sm:$0xff]
          %v988 = vld [vmem:[#allocation8 + $0x68] sm:$0xff]
          %v989 = vld [vmem:[#allocation8 + $0x70] sm:$0xff]
          %v990 = vld [vmem:[#allocation8 + $0x78] sm:$0xff]
          %991 = vmatprep.subr.mxu0 0.0
          %992 = vmatpush1.msra.mxu0 %v990
          %993 = vmatprep.subr.mxu0 0.0
          %994 = vmatpush1.msra.mxu0 %v989
          %995 = vmatprep.subr.mxu0 0.0
          %996 = vmatpush1.msra.mxu0 %v988
          %997 = vmatprep.subr.mxu0 0.0
          %998 = vmatpush1.msra.mxu0 %v987
          %999 = vmatprep.subr.mxu0 0.0
          %1000 = vmatpush1.msra.mxu0 %v986
          %1001 = vmatprep.subr.mxu0 0.0
          %1002 = vmatpush1.msra.mxu0 %v985
          %1003 = vmatprep.subr.mxu0 0.0
          %1004 = vmatpush1.msra.mxu0 %v984
          %1005 = vmatprep.subr.mxu0 0.0
          %1006 = vmatpush1.msra.mxu0 %v983
          %1007 = vmatprep.subr.mxu0 0.0
          %1008 = vmatpush1.msra.mxu0 %v982
          %1009 = vmatprep.subr.mxu0 0.0
          %1010 = vmatpush1.msra.mxu0 %v981
          %1011 = vmatprep.subr.mxu0 0.0
          %1012 = vmatpush1.msra.mxu0 %v980
          %1013 = vmatprep.subr.mxu0 0.0
          %1014 = vmatpush1.msra.mxu0 %v979
          %1015 = vmatprep.subr.mxu0 0.0
          %1016 = vmatpush1.msra.mxu0 %v978
          %1017 = vmatprep.subr.mxu0 0.0
          %1018 = vmatpush1.msra.mxu0 %v977
          %1019 = vmatprep.subr.mxu0 0.0
          %1020 = vmatpush1.msra.mxu0 %v976
          %1021 = vmatprep.subr.mxu0 0.0
          %1022 = vmatpush1.msra.mxu0 %v975
          %1023 = vmatprep.subr.mxu0 0.0
          %1024 = vmatpush2.msra.mxu0 0.0
          %1025 = vmatprep.subr.mxu0 0.0
          %1026 = vmatpush2.msra.mxu0 0.0
          %1027 = vmatprep.subr.mxu0 0.0
          %1028 = vmatpush2.msra.mxu0 0.0
          %1029 = vmatprep.subr.mxu0 0.0
          %1030 = vmatpush2.msra.mxu0 0.0
          %1031 = vmatprep.subr.mxu0 0.0
          %1032 = vmatpush2.msra.mxu0 0.0
          %1033 = vmatprep.subr.mxu0 0.0
          %1034 = vmatpush2.msra.mxu0 0.0
          %1035 = vmatprep.subr.mxu0 0.0
          %1036 = vmatpush2.msra.mxu0 0.0
          %1037 = vmatprep.subr.mxu0 0.0
          %1038 = vmatpush2.msra.mxu0 0.0
          %1039 = vmatprep.subr.mxu0 0.0
          %1040 = vmatpush2.msra.mxu0 0.0
          %1041 = vmatprep.subr.mxu0 0.0
          %1042 = vmatpush2.msra.mxu0 0.0
          %1043 = vmatprep.subr.mxu0 0.0
          %1044 = vmatpush2.msra.mxu0 0.0
          %1045 = vmatprep.subr.mxu0 0.0
          %1046 = vmatpush2.msra.mxu0 0.0
          %1047 = vmatprep.subr.mxu0 0.0
          %1048 = vmatpush2.msra.mxu0 0.0
          %1049 = vmatprep.subr.mxu0 0.0
          %1050 = vmatpush2.msra.mxu0 0.0
          %1051 = vmatprep.subr.mxu0 0.0
          %1052 = vmatpush2.msra.mxu0 0.0
          %1053 = vmatprep.subr.mxu0 0.0
          %1054 = vmatpush2.msra.mxu0 0.0
          %1055 = vmatprep.mubr.f32.mxu0 0.0
          %1056 = vmatmul.mubr.f32.gmra.mxu0 %v974
          %v1057 = vpop.f32.mrf.mxu0
          %v1058 = vadd.f32 0.0, %v1057
          %v1059 = vpop.f32.mrf.mxu0
          %1060 = vdwg.mxu0
          %v1061 = vadd.f32 %v973, %v1058
          %v1062 = vtanh.pop %v1061
          %1063 = vst [vmem:[#allocation2] sm:$0xff] %v1062
          %1064 = vst [vmem:[%s972] sm:$0xff] %v1062
          %s1065 = scalar_lea.vmem [#allocation3], 40
          %v1066 = vld [vmem:[%s1065] sm:$0xff]
          %v1067 = vld [vmem:[#allocation2] sm:$0xff]
          %v1068 = vld [vmem:[#allocation8] sm:$0xff]
          %v1069 = vld [vmem:[#allocation8 + $0x8] sm:$0xff]
          %v1070 = vld [vmem:[#allocation8 + $0x10] sm:$0xff]
          %v1071 = vld [vmem:[#allocation8 + $0x18] sm:$0xff]
          %v1072 = vld [vmem:[#allocation8 + $0x20] sm:$0xff]
          %v1073 = vld [vmem:[#allocation8 + $0x28] sm:$0xff]
          %v1074 = vld [vmem:[#allocation8 + $0x30] sm:$0xff]
          %v1075 = vld [vmem:[#allocation8 + $0x38] sm:$0xff]
          %v1076 = vld [vmem:[#allocation8 + $0x40] sm:$0xff]
          %v1077 = vld [vmem:[#allocation8 + $0x48] sm:$0xff]
          %v1078 = vld [vmem:[#allocation8 + $0x50] sm:$0xff]
          %v1079 = vld [vmem:[#allocation8 + $0x58] sm:$0xff]
          %v1080 = vld [vmem:[#allocation8 + $0x60] sm:$0xff]
          %v1081 = vld [vmem:[#allocation8 + $0x68] sm:$0xff]
          %v1082 = vld [vmem:[#allocation8 + $0x70] sm:$0xff]
          %v1083 = vld [vmem:[#allocation8 + $0x78] sm:$0xff]
          %1084 = vmatprep.subr.mxu0 0.0
          %1085 = vmatpush1.msra.mxu0 %v1083
          %1086 = vmatprep.subr.mxu0 0.0
          %1087 = vmatpush1.msra.mxu0 %v1082
          %1088 = vmatprep.subr.mxu0 0.0
          %1089 = vmatpush1.msra.mxu0 %v1081
          %1090 = vmatprep.subr.mxu0 0.0
          %1091 = vmatpush1.msra.mxu0 %v1080
          %1092 = vmatprep.subr.mxu0 0.0
          %1093 = vmatpush1.msra.mxu0 %v1079
          %1094 = vmatprep.subr.mxu0 0.0
          %1095 = vmatpush1.msra.mxu0 %v1078
          %1096 = vmatprep.subr.mxu0 0.0
          %1097 = vmatpush1.msra.mxu0 %v1077
          %1098 = vmatprep.subr.mxu0 0.0
          %1099 = vmatpush1.msra.mxu0 %v1076
          %1100 = vmatprep.subr.mxu0 0.0
          %1101 = vmatpush1.msra.mxu0 %v1075
          %1102 = vmatprep.subr.mxu0 0.0
          %1103 = vmatpush1.msra.mxu0 %v1074
          %1104 = vmatprep.subr.mxu0 0.0
          %1105 = vmatpush1.msra.mxu0 %v1073
          %1106 = vmatprep.subr.mxu0 0.0
          %1107 = vmatpush1.msra.mxu0 %v1072
          %1108 = vmatprep.subr.mxu0 0.0
          %1109 = vmatpush1.msra.mxu0 %v1071
          %1110 = vmatprep.subr.mxu0 0.0
          %1111 = vmatpush1.msra.mxu0 %v1070
          %1112 = vmatprep.subr.mxu0 0.0
          %1113 = vmatpush1.msra.mxu0 %v1069
          %1114 = vmatprep.subr.mxu0 0.0
          %1115 = vmatpush1.msra.mxu0 %v1068
          %1116 = vmatprep.subr.mxu0 0.0
          %1117 = vmatpush2.msra.mxu0 0.0
          %1118 = vmatprep.subr.mxu0 0.0
          %1119 = vmatpush2.msra.mxu0 0.0
          %1120 = vmatprep.subr.mxu0 0.0
          %1121 = vmatpush2.msra.mxu0 0.0
          %1122 = vmatprep.subr.mxu0 0.0
          %1123 = vmatpush2.msra.mxu0 0.0
          %1124 = vmatprep.subr.mxu0 0.0
          %1125 = vmatpush2.msra.mxu0 0.0
          %1126 = vmatprep.subr.mxu0 0.0
          %1127 = vmatpush2.msra.mxu0 0.0
          %1128 = vmatprep.subr.mxu0 0.0
          %1129 = vmatpush2.msra.mxu0 0.0
          %1130 = vmatprep.subr.mxu0 0.0
          %1131 = vmatpush2.msra.mxu0 0.0
          %1132 = vmatprep.subr.mxu0 0.0
          %1133 = vmatpush2.msra.mxu0 0.0
          %1134 = vmatprep.subr.mxu0 0.0
          %1135 = vmatpush2.msra.mxu0 0.0
          %1136 = vmatprep.subr.mxu0 0.0
          %1137 = vmatpush2.msra.mxu0 0.0
          %1138 = vmatprep.subr.mxu0 0.0
          %1139 = vmatpush2.msra.mxu0 0.0
          %1140 = vmatprep.subr.mxu0 0.0
          %1141 = vmatpush2.msra.mxu0 0.0
          %1142 = vmatprep.subr.mxu0 0.0
          %1143 = vmatpush2.msra.mxu0 0.0
          %1144 = vmatprep.subr.mxu0 0.0
          %1145 = vmatpush2.msra.mxu0 0.0
          %1146 = vmatprep.subr.mxu0 0.0
          %1147 = vmatpush2.msra.mxu0 0.0
          %1148 = vmatprep.mubr.f32.mxu0 0.0
          %1149 = vmatmul.mubr.f32.gmra.mxu0 %v1067
          %v1150 = vpop.f32.mrf.mxu0
          %v1151 = vadd.f32 0.0, %v1150
          %v1152 = vpop.f32.mrf.mxu0
          %1153 = vdwg.mxu0
          %v1154 = vadd.f32 %v1066, %v1151
          %v1155 = vtanh.pop %v1154
          %1156 = vst [vmem:[#allocation2] sm:$0xff] %v1155
          %1157 = vst [vmem:[%s1065] sm:$0xff] %v1155
          %s1158 = scalar_lea.vmem [#allocation3], 48
          %v1159 = vld [vmem:[%s1158] sm:$0xff]
          %v1160 = vld [vmem:[#allocation2] sm:$0xff]
          %v1161 = vld [vmem:[#allocation8] sm:$0xff]
          %v1162 = vld [vmem:[#allocation8 + $0x8] sm:$0xff]
          %v1163 = vld [vmem:[#allocation8 + $0x10] sm:$0xff]
          %v1164 = vld [vmem:[#allocation8 + $0x18] sm:$0xff]
          %v1165 = vld [vmem:[#allocation8 + $0x20] sm:$0xff]
          %v1166 = vld [vmem:[#allocation8 + $0x28] sm:$0xff]
          %v1167 = vld [vmem:[#allocation8 + $0x30] sm:$0xff]
          %v1168 = vld [vmem:[#allocation8 + $0x38] sm:$0xff]
          %v1169 = vld [vmem:[#allocation8 + $0x40] sm:$0xff]
          %v1170 = vld [vmem:[#allocation8 + $0x48] sm:$0xff]
          %v1171 = vld [vmem:[#allocation8 + $0x50] sm:$0xff]
          %v1172 = vld [vmem:[#allocation8 + $0x58] sm:$0xff]
          %v1173 = vld [vmem:[#allocation8 + $0x60] sm:$0xff]
          %v1174 = vld [vmem:[#allocation8 + $0x68] sm:$0xff]
          %v1175 = vld [vmem:[#allocation8 + $0x70] sm:$0xff]
          %v1176 = vld [vmem:[#allocation8 + $0x78] sm:$0xff]
          %1177 = vmatprep.subr.mxu0 0.0
          %1178 = vmatpush1.msra.mxu0 %v1176
          %1179 = vmatprep.subr.mxu0 0.0
          %1180 = vmatpush1.msra.mxu0 %v1175
          %1181 = vmatprep.subr.mxu0 0.0
          %1182 = vmatpush1.msra.mxu0 %v1174
          %1183 = vmatprep.subr.mxu0 0.0
          %1184 = vmatpush1.msra.mxu0 %v1173
          %1185 = vmatprep.subr.mxu0 0.0
          %1186 = vmatpush1.msra.mxu0 %v1172
          %1187 = vmatprep.subr.mxu0 0.0
          %1188 = vmatpush1.msra.mxu0 %v1171
          %1189 = vmatprep.subr.mxu0 0.0
          %1190 = vmatpush1.msra.mxu0 %v1170
          %1191 = vmatprep.subr.mxu0 0.0
          %1192 = vmatpush1.msra.mxu0 %v1169
          %1193 = vmatprep.subr.mxu0 0.0
          %1194 = vmatpush1.msra.mxu0 %v1168
          %1195 = vmatprep.subr.mxu0 0.0
          %1196 = vmatpush1.msra.mxu0 %v1167
          %1197 = vmatprep.subr.mxu0 0.0
          %1198 = vmatpush1.msra.mxu0 %v1166
          %1199 = vmatprep.subr.mxu0 0.0
          %1200 = vmatpush1.msra.mxu0 %v1165
          %1201 = vmatprep.subr.mxu0 0.0
          %1202 = vmatpush1.msra.mxu0 %v1164
          %1203 = vmatprep.subr.mxu0 0.0
          %1204 = vmatpush1.msra.mxu0 %v1163
          %1205 = vmatprep.subr.mxu0 0.0
          %1206 = vmatpush1.msra.mxu0 %v1162
          %1207 = vmatprep.subr.mxu0 0.0
          %1208 = vmatpush1.msra.mxu0 %v1161
          %1209 = vmatprep.subr.mxu0 0.0
          %1210 = vmatpush2.msra.mxu0 0.0
          %1211 = vmatprep.subr.mxu0 0.0
          %1212 = vmatpush2.msra.mxu0 0.0
          %1213 = vmatprep.subr.mxu0 0.0
          %1214 = vmatpush2.msra.mxu0 0.0
          %1215 = vmatprep.subr.mxu0 0.0
          %1216 = vmatpush2.msra.mxu0 0.0
          %1217 = vmatprep.subr.mxu0 0.0
          %1218 = vmatpush2.msra.mxu0 0.0
          %1219 = vmatprep.subr.mxu0 0.0
          %1220 = vmatpush2.msra.mxu0 0.0
          %1221 = vmatprep.subr.mxu0 0.0
          %1222 = vmatpush2.msra.mxu0 0.0
          %1223 = vmatprep.subr.mxu0 0.0
          %1224 = vmatpush2.msra.mxu0 0.0
          %1225 = vmatprep.subr.mxu0 0.0
          %1226 = vmatpush2.msra.mxu0 0.0
          %1227 = vmatprep.subr.mxu0 0.0
          %1228 = vmatpush2.msra.mxu0 0.0
          %1229 = vmatprep.subr.mxu0 0.0
          %1230 = vmatpush2.msra.mxu0 0.0
          %1231 = vmatprep.subr.mxu0 0.0
          %1232 = vmatpush2.msra.mxu0 0.0
          %1233 = vmatprep.subr.mxu0 0.0
          %1234 = vmatpush2.msra.mxu0 0.0
          %1235 = vmatprep.subr.mxu0 0.0
          %1236 = vmatpush2.msra.mxu0 0.0
          %1237 = vmatprep.subr.mxu0 0.0
          %1238 = vmatpush2.msra.mxu0 0.0
          %1239 = vmatprep.subr.mxu0 0.0
          %1240 = vmatpush2.msra.mxu0 0.0
          %1241 = vmatprep.mubr.f32.mxu0 0.0
          %1242 = vmatmul.mubr.f32.gmra.mxu0 %v1160
          %v1243 = vpop.f32.mrf.mxu0
          %v1244 = vadd.f32 0.0, %v1243
          %v1245 = vpop.f32.mrf.mxu0
          %1246 = vdwg.mxu0
          %v1247 = vadd.f32 %v1159, %v1244
          %v1248 = vtanh.pop %v1247
          %1249 = vst [vmem:[#allocation2] sm:$0xff] %v1248
          %1250 = vst [vmem:[%s1158] sm:$0xff] %v1248
          %s1251 = scalar_lea.vmem [#allocation3], 56
          %v1252 = vld [vmem:[%s1251] sm:$0xff]
          %v1253 = vld [vmem:[#allocation2] sm:$0xff]
          %v1254 = vld [vmem:[#allocation8] sm:$0xff]
          %v1255 = vld [vmem:[#allocation8 + $0x8] sm:$0xff]
          %v1256 = vld [vmem:[#allocation8 + $0x10] sm:$0xff]
          %v1257 = vld [vmem:[#allocation8 + $0x18] sm:$0xff]
          %v1258 = vld [vmem:[#allocation8 + $0x20] sm:$0xff]
          %v1259 = vld [vmem:[#allocation8 + $0x28] sm:$0xff]
          %v1260 = vld [vmem:[#allocation8 + $0x30] sm:$0xff]
          %v1261 = vld [vmem:[#allocation8 + $0x38] sm:$0xff]
          %v1262 = vld [vmem:[#allocation8 + $0x40] sm:$0xff]
          %v1263 = vld [vmem:[#allocation8 + $0x48] sm:$0xff]
          %v1264 = vld [vmem:[#allocation8 + $0x50] sm:$0xff]
          %v1265 = vld [vmem:[#allocation8 + $0x58] sm:$0xff]
          %v1266 = vld [vmem:[#allocation8 + $0x60] sm:$0xff]
          %v1267 = vld [vmem:[#allocation8 + $0x68] sm:$0xff]
          %v1268 = vld [vmem:[#allocation8 + $0x70] sm:$0xff]
          %v1269 = vld [vmem:[#allocation8 + $0x78] sm:$0xff]
          %1270 = vmatprep.subr.mxu0 0.0
          %1271 = vmatpush1.msra.mxu0 %v1269
          %1272 = vmatprep.subr.mxu0 0.0
          %1273 = vmatpush1.msra.mxu0 %v1268
          %1274 = vmatprep.subr.mxu0 0.0
          %1275 = vmatpush1.msra.mxu0 %v1267
          %1276 = vmatprep.subr.mxu0 0.0
          %1277 = vmatpush1.msra.mxu0 %v1266
          %1278 = vmatprep.subr.mxu0 0.0
          %1279 = vmatpush1.msra.mxu0 %v1265
          %1280 = vmatprep.subr.mxu0 0.0
          %1281 = vmatpush1.msra.mxu0 %v1264
          %1282 = vmatprep.subr.mxu0 0.0
          %1283 = vmatpush1.msra.mxu0 %v1263
          %1284 = vmatprep.subr.mxu0 0.0
          %1285 = vmatpush1.msra.mxu0 %v1262
          %1286 = vmatprep.subr.mxu0 0.0
          %1287 = vmatpush1.msra.mxu0 %v1261
          %1288 = vmatprep.subr.mxu0 0.0
          %1289 = vmatpush1.msra.mxu0 %v1260
          %1290 = vmatprep.subr.mxu0 0.0
          %1291 = vmatpush1.msra.mxu0 %v1259
          %1292 = vmatprep.subr.mxu0 0.0
          %1293 = vmatpush1.msra.mxu0 %v1258
          %1294 = vmatprep.subr.mxu0 0.0
          %1295 = vmatpush1.msra.mxu0 %v1257
          %1296 = vmatprep.subr.mxu0 0.0
          %1297 = vmatpush1.msra.mxu0 %v1256
          %1298 = vmatprep.subr.mxu0 0.0
          %1299 = vmatpush1.msra.mxu0 %v1255
          %1300 = vmatprep.subr.mxu0 0.0
          %1301 = vmatpush1.msra.mxu0 %v1254
          %1302 = vmatprep.subr.mxu0 0.0
          %1303 = vmatpush2.msra.mxu0 0.0
          %1304 = vmatprep.subr.mxu0 0.0
          %1305 = vmatpush2.msra.mxu0 0.0
          %1306 = vmatprep.subr.mxu0 0.0
          %1307 = vmatpush2.msra.mxu0 0.0
          %1308 = vmatprep.subr.mxu0 0.0
          %1309 = vmatpush2.msra.mxu0 0.0
          %1310 = vmatprep.subr.mxu0 0.0
          %1311 = vmatpush2.msra.mxu0 0.0
          %1312 = vmatprep.subr.mxu0 0.0
          %1313 = vmatpush2.msra.mxu0 0.0
          %1314 = vmatprep.subr.mxu0 0.0
          %1315 = vmatpush2.msra.mxu0 0.0
          %1316 = vmatprep.subr.mxu0 0.0
          %1317 = vmatpush2.msra.mxu0 0.0
          %1318 = vmatprep.subr.mxu0 0.0
          %1319 = vmatpush2.msra.mxu0 0.0
          %1320 = vmatprep.subr.mxu0 0.0
          %1321 = vmatpush2.msra.mxu0 0.0
          %1322 = vmatprep.subr.mxu0 0.0
          %1323 = vmatpush2.msra.mxu0 0.0
          %1324 = vmatprep.subr.mxu0 0.0
          %1325 = vmatpush2.msra.mxu0 0.0
          %1326 = vmatprep.subr.mxu0 0.0
          %1327 = vmatpush2.msra.mxu0 0.0
          %1328 = vmatprep.subr.mxu0 0.0
          %1329 = vmatpush2.msra.mxu0 0.0
          %1330 = vmatprep.subr.mxu0 0.0
          %1331 = vmatpush2.msra.mxu0 0.0
          %1332 = vmatprep.subr.mxu0 0.0
          %1333 = vmatpush2.msra.mxu0 0.0
          %1334 = vmatprep.mubr.f32.mxu0 0.0
          %1335 = vmatmul.mubr.f32.gmra.mxu0 %v1253
          %v1336 = vpop.f32.mrf.mxu0
          %v1337 = vadd.f32 0.0, %v1336
          %v1338 = vpop.f32.mrf.mxu0
          %1339 = vdwg.mxu0
          %v1340 = vadd.f32 %v1252, %v1337
          %v1341 = vtanh.pop %v1340
          %1342 = vst [vmem:[#allocation2] sm:$0xff] %v1341
          %1343 = vst [vmem:[%s1251] sm:$0xff] %v1341
          %v1344 = vld [vmem:[#allocation2] sm:$0xff]
          %1345 = vst [vmem:[%s8] sm:$0xff] %v1344
          %vm1346 = vcmask 7168
          %1347 = vst.msk [vmem:[#allocation4] sm:$0xff] %vm1346, -inf
          %1348 = vst.msk [vmem:[#allocation4 + $0x8] sm:$0xff] %vm1346, -inf
          %1349 = vst.msk [vmem:[#allocation4 + $0x10] sm:$0xff] %vm1346, -inf
          %1350 = vst.msk [vmem:[#allocation4 + $0x18] sm:$0xff] %vm1346, -inf
          %1351 = vst.msk [vmem:[#allocation4 + $0x20] sm:$0xff] %vm1346, -inf
          %1352 = vst.msk [vmem:[#allocation4 + $0x28] sm:$0xff] %vm1346, -inf
          %1353 = vst.msk [vmem:[#allocation4 + $0x30] sm:$0xff] %vm1346, -inf
          %1354 = vst.msk [vmem:[#allocation4 + $0x38] sm:$0xff] %vm1346, -inf
          %1355 = vst.msk [vmem:[#allocation5] sm:$0xff] %vm1346, 0.0
          %1356 = vst.msk [vmem:[#allocation5 + $0x8] sm:$0xff] %vm1346, 0.0
          %1357 = vst.msk [vmem:[#allocation5 + $0x10] sm:$0xff] %vm1346, 0.0
          %1358 = vst.msk [vmem:[#allocation5 + $0x18] sm:$0xff] %vm1346, 0.0
          %1359 = vst.msk [vmem:[#allocation5 + $0x20] sm:$0xff] %vm1346, 0.0
          %1360 = vst.msk [vmem:[#allocation5 + $0x28] sm:$0xff] %vm1346, 0.0
          %1361 = vst.msk [vmem:[#allocation5 + $0x30] sm:$0xff] %vm1346, 0.0
          %1362 = vst.msk [vmem:[#allocation5 + $0x38] sm:$0xff] %vm1346, 0.0
        $region98: #{rnn_model_forward.1} parent=81 // pred_fallthru
          _
        %v1363 = vld [vmem:[#allocation3] sm:$0xff]
        %v1364 = vld [vmem:[#allocation3 + $0x8] sm:$0xff]
        %v1365 = vld [vmem:[#allocation3 + $0x10] sm:$0xff]
        %v1366 = vld [vmem:[#allocation3 + $0x18] sm:$0xff]
        %v1367 = vld [vmem:[#allocation3 + $0x20] sm:$0xff]
        %v1368 = vld [vmem:[#allocation3 + $0x28] sm:$0xff]
        %v1369 = vld [vmem:[#allocation3 + $0x30] sm:$0xff]
        %v1370 = vld [vmem:[#allocation3 + $0x38] sm:$0xff]
        %v1371 = vld [vmem:[%s413] sm:$0xff]
        %v1372 = vld [vmem:[%s413 + $0x8] sm:$0xff]
        %v1373 = vld [vmem:[%s413 + $0x10] sm:$0xff]
        %v1374 = vld [vmem:[%s413 + $0x18] sm:$0xff]
        %v1375 = vld [vmem:[%s413 + $0x20] sm:$0xff]
        %v1376 = vld [vmem:[%s413 + $0x28] sm:$0xff]
        %v1377 = vld [vmem:[%s413 + $0x30] sm:$0xff]
        %v1378 = vld [vmem:[%s413 + $0x38] sm:$0xff]
        %v1379 = vld [vmem:[%s413 + $0x40] sm:$0xff]
        %v1380 = vld [vmem:[%s413 + $0x48] sm:$0xff]
        %v1381 = vld [vmem:[%s413 + $0x50] sm:$0xff]
        %v1382 = vld [vmem:[%s413 + $0x58] sm:$0xff]
        %v1383 = vld [vmem:[%s413 + $0x60] sm:$0xff]
        %v1384 = vld [vmem:[%s413 + $0x68] sm:$0xff]
        %v1385 = vld [vmem:[%s413 + $0x70] sm:$0xff]
        %v1386 = vld [vmem:[%s413 + $0x78] sm:$0xff]
        %v1387 = vld [vmem:[%s448] sm:$0x1]
        %v1389 = vlaneseq
        %v1390 = vshrl.u32 %v1389, 7
        %v1391 = vsub.s32 0, %v1390
        %v1392 = vrot.slane %v1387, %v1391
        %1394 = vmatprep.subr.mxu0 0.0
        %1395 = vmatpush1.msra.mxu0 %v1386
        %1396 = vmatprep.subr.mxu0 0.0
        %1397 = vmatpush1.msra.mxu0 %v1385
        %1398 = vmatprep.subr.mxu0 0.0
        %1399 = vmatpush1.msra.mxu0 %v1384
        %1400 = vmatprep.subr.mxu0 0.0
        %1401 = vmatpush1.msra.mxu0 %v1383
        %1402 = vmatprep.subr.mxu0 0.0
        %1403 = vmatpush1.msra.mxu0 %v1382
        %1404 = vmatprep.subr.mxu0 0.0
        %1405 = vmatpush1.msra.mxu0 %v1381
        %1406 = vmatprep.subr.mxu0 0.0
        %1407 = vmatpush1.msra.mxu0 %v1380
        %1408 = vmatprep.subr.mxu0 0.0
        %1409 = vmatpush1.msra.mxu0 %v1379
        %1410 = vmatprep.subr.mxu0 0.0
        %1411 = vmatpush1.msra.mxu0 %v1378
        %1412 = vmatprep.subr.mxu0 0.0
        %1413 = vmatpush1.msra.mxu0 %v1377
        %1414 = vmatprep.subr.mxu0 0.0
        %1415 = vmatpush1.msra.mxu0 %v1376
        %1416 = vmatprep.subr.mxu0 0.0
        %1417 = vmatpush1.msra.mxu0 %v1375
        %1418 = vmatprep.subr.mxu0 0.0
        %1419 = vmatpush1.msra.mxu0 %v1374
        %1420 = vmatprep.subr.mxu0 0.0
        %1421 = vmatpush1.msra.mxu0 %v1373
        %1422 = vmatprep.subr.mxu0 0.0
        %1423 = vmatpush1.msra.mxu0 %v1372
        %1424 = vmatprep.subr.mxu0 0.0
        %1425 = vmatpush1.msra.mxu0 %v1371
        %1426 = vmatprep.subr.mxu0 0.0
        %1427 = vmatpush2.msra.mxu0 0.0
        %1428 = vmatprep.subr.mxu0 0.0
        %1429 = vmatpush2.msra.mxu0 0.0
        %1430 = vmatprep.subr.mxu0 0.0
        %1431 = vmatpush2.msra.mxu0 0.0
        %1432 = vmatprep.subr.mxu0 0.0
        %1433 = vmatpush2.msra.mxu0 0.0
        %1434 = vmatprep.subr.mxu0 0.0
        %1435 = vmatpush2.msra.mxu0 0.0
        %1436 = vmatprep.subr.mxu0 0.0
        %1437 = vmatpush2.msra.mxu0 0.0
        %1438 = vmatprep.subr.mxu0 0.0
        %1439 = vmatpush2.msra.mxu0 0.0
        %1440 = vmatprep.subr.mxu0 0.0
        %1441 = vmatpush2.msra.mxu0 0.0
        %1442 = vmatprep.subr.mxu0 0.0
        %1443 = vmatpush2.msra.mxu0 0.0
        %1444 = vmatprep.subr.mxu0 0.0
        %1445 = vmatpush2.msra.mxu0 0.0
        %1446 = vmatprep.subr.mxu0 0.0
        %1447 = vmatpush2.msra.mxu0 0.0
        %1448 = vmatprep.subr.mxu0 0.0
        %1449 = vmatpush2.msra.mxu0 0.0
        %1450 = vmatprep.subr.mxu0 0.0
        %1451 = vmatpush2.msra.mxu0 0.0
        %1452 = vmatprep.subr.mxu0 0.0
        %1453 = vmatpush2.msra.mxu0 0.0
        %1454 = vmatprep.subr.mxu0 0.0
        %1455 = vmatpush2.msra.mxu0 0.0
        %1456 = vmatprep.subr.mxu0 0.0
        %1457 = vmatpush2.msra.mxu0 0.0
        %1458 = vmatprep.mubr.f32.mxu0 0.0
        %1459 = vmatmul.mubr.f32.gmra.mxu0 %v1363
        %v1460 = vpop.f32.mrf.mxu0
        %v1461 = vadd.f32 %v1392, %v1460
        %v1462 = vpop.f32.mrf.mxu0
        %1463 = vmatprep.mubr.f32.mxu0 0.0
        %1464 = vmatmul.mubr.f32.gmra.mxu0 %v1364
        %v1465 = vpop.f32.mrf.mxu0
        %v1466 = vadd.f32 %v1392, %v1465
        %v1467 = vpop.f32.mrf.mxu0
        %1468 = vmatprep.mubr.f32.mxu0 0.0
        %1469 = vmatmul.mubr.f32.gmra.mxu0 %v1365
        %v1470 = vpop.f32.mrf.mxu0
        %v1471 = vadd.f32 %v1392, %v1470
        %v1472 = vpop.f32.mrf.mxu0
        %1473 = vmatprep.mubr.f32.mxu0 0.0
        %1474 = vmatmul.mubr.f32.gmra.mxu0 %v1366
        %v1475 = vpop.f32.mrf.mxu0
        %v1476 = vadd.f32 %v1392, %v1475
        %v1477 = vpop.f32.mrf.mxu0
        %1478 = vmatprep.mubr.f32.mxu0 0.0
        %1479 = vmatmul.mubr.f32.gmra.mxu0 %v1367
        %v1480 = vpop.f32.mrf.mxu0
        %v1481 = vadd.f32 %v1392, %v1480
        %v1482 = vpop.f32.mrf.mxu0
        %1483 = vmatprep.mubr.f32.mxu0 0.0
        %1484 = vmatmul.mubr.f32.gmra.mxu0 %v1368
        %v1485 = vpop.f32.mrf.mxu0
        %v1486 = vadd.f32 %v1392, %v1485
        %v1487 = vpop.f32.mrf.mxu0
        %1488 = vmatprep.mubr.f32.mxu0 0.0
        %1489 = vmatmul.mubr.f32.gmra.mxu0 %v1369
        %v1490 = vpop.f32.mrf.mxu0
        %v1491 = vadd.f32 %v1392, %v1490
        %v1492 = vpop.f32.mrf.mxu0
        %1493 = vmatprep.mubr.f32.mxu0 0.0
        %1494 = vmatmul.mubr.f32.gmra.mxu0 %v1370
        %v1495 = vpop.f32.mrf.mxu0
        %v1496 = vadd.f32 %v1392, %v1495
        %v1497 = vpop.f32.mrf.mxu0
        %1498 = vdwg.mxu0
        // Predicated region
        $region99: #{rnn_model_forward.1} parent=81 // pred_check
          %p1499 = pneg %p449
        $region100: #{rnn_model_forward.1} parent=81 // pred_check_branch
          %1501 = sbr.rel (%p1499) target = $region102
        $region101: #{rnn_model_forward.1} parent=81 // pred_region
          %1502 = vmax.xlane.f32.xlu0 %v1461
          %v1503 = vpop.xlane.xlu0 %1502
          %1504 = vmax.xlane.f32.xlu0 %v1466
          %v1505 = vpop.xlane.xlu0 %1504
          %1506 = vmax.xlane.f32.xlu0 %v1471
          %v1507 = vpop.xlane.xlu0 %1506
          %1508 = vmax.xlane.f32.xlu0 %v1476
          %v1509 = vpop.xlane.xlu0 %1508
          %1510 = vmax.xlane.f32.xlu0 %v1481
          %v1511 = vpop.xlane.xlu0 %1510
          %1512 = vmax.xlane.f32.xlu0 %v1486
          %v1513 = vpop.xlane.xlu0 %1512
          %1514 = vmax.xlane.f32.xlu0 %v1491
          %v1515 = vpop.xlane.xlu0 %1514
          %1516 = vmax.xlane.f32.xlu0 %v1496
          %v1517 = vpop.xlane.xlu0 %1516
          %v1518 = vld [vmem:[#allocation4] sm:$0xff]
          %v1519 = vld [vmem:[#allocation4 + $0x8] sm:$0xff]
          %v1520 = vld [vmem:[#allocation4 + $0x10] sm:$0xff]
          %v1521 = vld [vmem:[#allocation4 + $0x18] sm:$0xff]
          %v1522 = vld [vmem:[#allocation4 + $0x20] sm:$0xff]
          %v1523 = vld [vmem:[#allocation4 + $0x28] sm:$0xff]
          %v1524 = vld [vmem:[#allocation4 + $0x30] sm:$0xff]
          %v1525 = vld [vmem:[#allocation4 + $0x38] sm:$0xff]
          %v1526 = vmax.f32 %v1518, %v1503
          %v1527 = vmax.f32 %v1519, %v1505
          %v1528 = vmax.f32 %v1520, %v1507
          %v1529 = vmax.f32 %v1521, %v1509
          %v1530 = vmax.f32 %v1522, %v1511
          %v1531 = vmax.f32 %v1523, %v1513
          %v1532 = vmax.f32 %v1524, %v1515
          %v1533 = vmax.f32 %v1525, %v1517
          %v1534 = vld [vmem:[#allocation5] sm:$0xff]
          %v1535 = vld [vmem:[#allocation5 + $0x8] sm:$0xff]
          %v1536 = vld [vmem:[#allocation5 + $0x10] sm:$0xff]
          %v1537 = vld [vmem:[#allocation5 + $0x18] sm:$0xff]
          %v1538 = vld [vmem:[#allocation5 + $0x20] sm:$0xff]
          %v1539 = vld [vmem:[#allocation5 + $0x28] sm:$0xff]
          %v1540 = vld [vmem:[#allocation5 + $0x30] sm:$0xff]
          %v1541 = vld [vmem:[#allocation5 + $0x38] sm:$0xff]
          %v1542 = vsub.f32 %v1518, %v1526
          %v1543 = vsub.f32 %v1519, %v1527
          %v1544 = vsub.f32 %v1520, %v1528
          %v1545 = vsub.f32 %v1521, %v1529
          %v1546 = vsub.f32 %v1522, %v1530
          %v1547 = vsub.f32 %v1523, %v1531
          %v1548 = vsub.f32 %v1524, %v1532
          %v1549 = vsub.f32 %v1525, %v1533
          %v1550 = vmul.f32 %v1542, 1.442695
          %v1551 = vpow.pop %v1550
          %v1552 = vmul.f32 %v1543, 1.442695
          %v1553 = vpow.pop %v1552
          %v1554 = vmul.f32 %v1544, 1.442695
          %v1555 = vpow.pop %v1554
          %v1556 = vmul.f32 %v1545, 1.442695
          %v1557 = vpow.pop %v1556
          %v1558 = vmul.f32 %v1546, 1.442695
          %v1559 = vpow.pop %v1558
          %v1560 = vmul.f32 %v1547, 1.442695
          %v1561 = vpow.pop %v1560
          %v1562 = vmul.f32 %v1548, 1.442695
          %v1563 = vpow.pop %v1562
          %v1564 = vmul.f32 %v1549, 1.442695
          %v1565 = vpow.pop %v1564
          %v1566 = vmul.f32 %v1534, %v1551
          %v1567 = vmul.f32 %v1535, %v1553
          %v1568 = vmul.f32 %v1536, %v1555
          %v1569 = vmul.f32 %v1537, %v1557
          %v1570 = vmul.f32 %v1538, %v1559
          %v1571 = vmul.f32 %v1539, %v1561
          %v1572 = vmul.f32 %v1540, %v1563
          %v1573 = vmul.f32 %v1541, %v1565
          %1575 = vset.pattern.permute.xlu0 0
          %1576 = vperm.xlu0 %1575, %v1526
          %v1577 = vpop.permute.xlu0 %1576
          %1580 = vset.pattern.permute.xlu0 0
          %1581 = vperm.xlu0 %1580, %v1527
          %v1582 = vpop.permute.xlu0 %1581
          %1585 = vset.pattern.permute.xlu0 0
          %1586 = vperm.xlu0 %1585, %v1528
          %v1587 = vpop.permute.xlu0 %1586
          %1590 = vset.pattern.permute.xlu0 0
          %1591 = vperm.xlu0 %1590, %v1529
          %v1592 = vpop.permute.xlu0 %1591
          %1595 = vset.pattern.permute.xlu0 0
          %1596 = vperm.xlu0 %1595, %v1530
          %v1597 = vpop.permute.xlu0 %1596
          %1600 = vset.pattern.permute.xlu0 0
          %1601 = vperm.xlu0 %1600, %v1531
          %v1602 = vpop.permute.xlu0 %1601
          %1605 = vset.pattern.permute.xlu0 0
          %1606 = vperm.xlu0 %1605, %v1532
          %v1607 = vpop.permute.xlu0 %1606
          %1610 = vset.pattern.permute.xlu0 0
          %1611 = vperm.xlu0 %1610, %v1533
          %v1612 = vpop.permute.xlu0 %1611
          %v1614 = vsub.f32 %v1461, %v1577
          %v1615 = vsub.f32 %v1466, %v1582
          %v1616 = vsub.f32 %v1471, %v1587
          %v1617 = vsub.f32 %v1476, %v1592
          %v1618 = vsub.f32 %v1481, %v1597
          %v1619 = vsub.f32 %v1486, %v1602
          %v1620 = vsub.f32 %v1491, %v1607
          %v1621 = vsub.f32 %v1496, %v1612
          %v1622 = vmul.f32 %v1614, 1.442695
          %v1623 = vpow.pop %v1622
          %v1624 = vmul.f32 %v1615, 1.442695
          %v1625 = vpow.pop %v1624
          %v1626 = vmul.f32 %v1616, 1.442695
          %v1627 = vpow.pop %v1626
          %v1628 = vmul.f32 %v1617, 1.442695
          %v1629 = vpow.pop %v1628
          %v1630 = vmul.f32 %v1618, 1.442695
          %v1631 = vpow.pop %v1630
          %v1632 = vmul.f32 %v1619, 1.442695
          %v1633 = vpow.pop %v1632
          %v1634 = vmul.f32 %v1620, 1.442695
          %v1635 = vpow.pop %v1634
          %v1636 = vmul.f32 %v1621, 1.442695
          %v1637 = vpow.pop %v1636
          %1638 = vadd.xlane.f32.xlu0 %v1623
          %v1639 = vpop.xlane.xlu0 %1638
          %1640 = vadd.xlane.f32.xlu0 %v1625
          %v1641 = vpop.xlane.xlu0 %1640
          %1642 = vadd.xlane.f32.xlu0 %v1627
          %v1643 = vpop.xlane.xlu0 %1642
          %1644 = vadd.xlane.f32.xlu0 %v1629
          %v1645 = vpop.xlane.xlu0 %1644
          %1646 = vadd.xlane.f32.xlu0 %v1631
          %v1647 = vpop.xlane.xlu0 %1646
          %1648 = vadd.xlane.f32.xlu0 %v1633
          %v1649 = vpop.xlane.xlu0 %1648
          %1650 = vadd.xlane.f32.xlu0 %v1635
          %v1651 = vpop.xlane.xlu0 %1650
          %1652 = vadd.xlane.f32.xlu0 %v1637
          %v1653 = vpop.xlane.xlu0 %1652
          %v1654 = vadd.f32 %v1566, %v1639
          %v1655 = vadd.f32 %v1567, %v1641
          %v1656 = vadd.f32 %v1568, %v1643
          %v1657 = vadd.f32 %v1569, %v1645
          %v1658 = vadd.f32 %v1570, %v1647
          %v1659 = vadd.f32 %v1571, %v1649
          %v1660 = vadd.f32 %v1572, %v1651
          %v1661 = vadd.f32 %v1573, %v1653
          %vm1662 = vcmask 7168
          %1663 = vst.msk [vmem:[#allocation5] sm:$0xff] %vm1662, %v1654
          %1664 = vst.msk [vmem:[#allocation5 + $0x8] sm:$0xff] %vm1662, %v1655
          %1665 = vst.msk [vmem:[#allocation5 + $0x10] sm:$0xff] %vm1662, %v1656
          %1666 = vst.msk [vmem:[#allocation5 + $0x18] sm:$0xff] %vm1662, %v1657
          %1667 = vst.msk [vmem:[#allocation5 + $0x20] sm:$0xff] %vm1662, %v1658
          %1668 = vst.msk [vmem:[#allocation5 + $0x28] sm:$0xff] %vm1662, %v1659
          %1669 = vst.msk [vmem:[#allocation5 + $0x30] sm:$0xff] %vm1662, %v1660
          %1670 = vst.msk [vmem:[#allocation5 + $0x38] sm:$0xff] %vm1662, %v1661
          %1671 = vst.msk [vmem:[#allocation4] sm:$0xff] %vm1662, %v1526
          %1672 = vst.msk [vmem:[#allocation4 + $0x8] sm:$0xff] %vm1662, %v1527
          %1673 = vst.msk [vmem:[#allocation4 + $0x10] sm:$0xff] %vm1662, %v1528
          %1674 = vst.msk [vmem:[#allocation4 + $0x18] sm:$0xff] %vm1662, %v1529
          %1675 = vst.msk [vmem:[#allocation4 + $0x20] sm:$0xff] %vm1662, %v1530
          %1676 = vst.msk [vmem:[#allocation4 + $0x28] sm:$0xff] %vm1662, %v1531
          %1677 = vst.msk [vmem:[#allocation4 + $0x30] sm:$0xff] %vm1662, %v1532
          %1678 = vst.msk [vmem:[#allocation4 + $0x38] sm:$0xff] %vm1662, %v1533
        $region102: #{rnn_model_forward.1} parent=81 // pred_fallthru
          _
        %p1679 = scmp.eq.s32.totalorder %s26, 1
        // Predicated region
        $region103: #{rnn_model_forward.1} parent=81 // pred_check
          %p1680 = pneg %p1679
        $region104: #{rnn_model_forward.1} parent=81 // pred_check_branch
          %1682 = sbr.rel (%p1680) target = $region106
        $region105: #{rnn_model_forward.1} parent=81 // pred_region
          %v1683 = vld [vmem:[#allocation4] sm:$0xff]
          %v1684 = vld [vmem:[#allocation4 + $0x8] sm:$0xff]
          %v1685 = vld [vmem:[#allocation4 + $0x10] sm:$0xff]
          %v1686 = vld [vmem:[#allocation4 + $0x18] sm:$0xff]
          %v1687 = vld [vmem:[#allocation4 + $0x20] sm:$0xff]
          %v1688 = vld [vmem:[#allocation4 + $0x28] sm:$0xff]
          %v1689 = vld [vmem:[#allocation4 + $0x30] sm:$0xff]
          %v1690 = vld [vmem:[#allocation4 + $0x38] sm:$0xff]
          %1692 = vset.pattern.permute.xlu0 0
          %1693 = vperm.xlu0 %1692, %v1683
          %v1694 = vpop.permute.xlu0 %1693
          %1697 = vset.pattern.permute.xlu0 0
          %1698 = vperm.xlu0 %1697, %v1684
          %v1699 = vpop.permute.xlu0 %1698
          %1702 = vset.pattern.permute.xlu0 0
          %1703 = vperm.xlu0 %1702, %v1685
          %v1704 = vpop.permute.xlu0 %1703
          %1707 = vset.pattern.permute.xlu0 0
          %1708 = vperm.xlu0 %1707, %v1686
          %v1709 = vpop.permute.xlu0 %1708
          %1712 = vset.pattern.permute.xlu0 0
          %1713 = vperm.xlu0 %1712, %v1687
          %v1714 = vpop.permute.xlu0 %1713
          %1717 = vset.pattern.permute.xlu0 0
          %1718 = vperm.xlu0 %1717, %v1688
          %v1719 = vpop.permute.xlu0 %1718
          %1722 = vset.pattern.permute.xlu0 0
          %1723 = vperm.xlu0 %1722, %v1689
          %v1724 = vpop.permute.xlu0 %1723
          %1727 = vset.pattern.permute.xlu0 0
          %1728 = vperm.xlu0 %1727, %v1690
          %v1729 = vpop.permute.xlu0 %1728
          %v1731 = vsub.f32 %v1461, %v1694
          %v1732 = vsub.f32 %v1466, %v1699
          %v1733 = vsub.f32 %v1471, %v1704
          %v1734 = vsub.f32 %v1476, %v1709
          %v1735 = vsub.f32 %v1481, %v1714
          %v1736 = vsub.f32 %v1486, %v1719
          %v1737 = vsub.f32 %v1491, %v1724
          %v1738 = vsub.f32 %v1496, %v1729
          %v1739 = vld [vmem:[#allocation5] sm:$0xff]
          %v1740 = vld [vmem:[#allocation5 + $0x8] sm:$0xff]
          %v1741 = vld [vmem:[#allocation5 + $0x10] sm:$0xff]
          %v1742 = vld [vmem:[#allocation5 + $0x18] sm:$0xff]
          %v1743 = vld [vmem:[#allocation5 + $0x20] sm:$0xff]
          %v1744 = vld [vmem:[#allocation5 + $0x28] sm:$0xff]
          %v1745 = vld [vmem:[#allocation5 + $0x30] sm:$0xff]
          %v1746 = vld [vmem:[#allocation5 + $0x38] sm:$0xff]
          %v1747 = vlog2.pop %v1739
          %v1748 = vmul.f32 %v1747, 0.6931472
          %v1749 = vlog2.pop %v1740
          %v1750 = vmul.f32 %v1749, 0.6931472
          %v1751 = vlog2.pop %v1741
          %v1752 = vmul.f32 %v1751, 0.6931472
          %v1753 = vlog2.pop %v1742
          %v1754 = vmul.f32 %v1753, 0.6931472
          %v1755 = vlog2.pop %v1743
          %v1756 = vmul.f32 %v1755, 0.6931472
          %v1757 = vlog2.pop %v1744
          %v1758 = vmul.f32 %v1757, 0.6931472
          %v1759 = vlog2.pop %v1745
          %v1760 = vmul.f32 %v1759, 0.6931472
          %v1761 = vlog2.pop %v1746
          %v1762 = vmul.f32 %v1761, 0.6931472
          %1764 = vset.pattern.permute.xlu0 0
          %1765 = vperm.xlu0 %1764, %v1748
          %v1766 = vpop.permute.xlu0 %1765
          %1769 = vset.pattern.permute.xlu0 0
          %1770 = vperm.xlu0 %1769, %v1750
          %v1771 = vpop.permute.xlu0 %1770
          %1774 = vset.pattern.permute.xlu0 0
          %1775 = vperm.xlu0 %1774, %v1752
          %v1776 = vpop.permute.xlu0 %1775
          %1779 = vset.pattern.permute.xlu0 0
          %1780 = vperm.xlu0 %1779, %v1754
          %v1781 = vpop.permute.xlu0 %1780
          %1784 = vset.pattern.permute.xlu0 0
          %1785 = vperm.xlu0 %1784, %v1756
          %v1786 = vpop.permute.xlu0 %1785
          %1789 = vset.pattern.permute.xlu0 0
          %1790 = vperm.xlu0 %1789, %v1758
          %v1791 = vpop.permute.xlu0 %1790
          %1794 = vset.pattern.permute.xlu0 0
          %1795 = vperm.xlu0 %1794, %v1760
          %v1796 = vpop.permute.xlu0 %1795
          %1799 = vset.pattern.permute.xlu0 0
          %1800 = vperm.xlu0 %1799, %v1762
          %v1801 = vpop.permute.xlu0 %1800
          %v1803 = vsub.f32 %v1731, %v1766
          %v1804 = vsub.f32 %v1732, %v1771
          %v1805 = vsub.f32 %v1733, %v1776
          %v1806 = vsub.f32 %v1734, %v1781
          %v1807 = vsub.f32 %v1735, %v1786
          %v1808 = vsub.f32 %v1736, %v1791
          %v1809 = vsub.f32 %v1737, %v1796
          %v1810 = vsub.f32 %v1738, %v1801
          %1811 = vst [vmem:[%s443] sm:$0xff] %v1803
          %1812 = vst [vmem:[%s443 + $0x8] sm:$0xff] %v1804
          %1813 = vst [vmem:[%s443 + $0x10] sm:$0xff] %v1805
          %1814 = vst [vmem:[%s443 + $0x18] sm:$0xff] %v1806
          %1815 = vst [vmem:[%s443 + $0x20] sm:$0xff] %v1807
          %1816 = vst [vmem:[%s443 + $0x28] sm:$0xff] %v1808
          %1817 = vst [vmem:[%s443 + $0x30] sm:$0xff] %v1809
          %1818 = vst [vmem:[%s443 + $0x38] sm:$0xff] %v1810
        $region106: #{rnn_model_forward.1} parent=81 // pred_fallthru
          _
        %s1819 = sand.u32 %s199, 1
        %s1820 = sand.u32 %s199, 1
        %s1821 = smul.addr %s1820, 64
        %s1822 = scalar_lea.vmem [#allocation11], %s1821
        // Predicated region
        $region107: #{rnn_model_forward.1} parent=81 // pred_check
          %p1823 = pneg %p209
        $region108: #{rnn_model_forward.1} parent=81 // pred_check_branch
          %1825 = sbr.rel (%p1823) target = $region110
        $region109: #{rnn_model_forward.1} parent=81 // pred_region
          %s1826 = smul.addr %s27, 8
          %s1827 = scalar_lea.vmem %s7, %s1826
          // Predicated region
          $region111: #{rnn_model_forward.1} parent=109 // pred_check
            _
          $region112: #{rnn_model_forward.1} parent=109 // pred_check_branch
            %1829 = sbr.rel (0) target = $region114
          $region113: #{rnn_model_forward.1} parent=109 // pred_region
            // Predicated region
            $region115: #{rnn_model_forward.1} parent=113 // pred_check
              _
            $region116: #{rnn_model_forward.1} parent=113 // pred_check_branch
              %1831 = sbr.rel (0) target = $region118
            $region117: #{rnn_model_forward.1} parent=113 // pred_region
              // Predicated region
              $region130: #{rnn_model_forward.1} parent=117 // pred_check
                _
              $region131: #{rnn_model_forward.1} parent=117 // pred_check_branch
                %1861 = sbr.rel (0) target = $region133
              $region132: #{rnn_model_forward.1} parent=117 // pred_region
                loop: start=0, step=1, limit=1
                $region134: #{rnn_model_forward.1} parent=132 // loop_pre_header
                  _
                $region135: #{rnn_model_forward.1} parent=132 // loop_header
                  %s1863 = sphi 0, %s1867
                  %p1864 = scmp.ge.s32.totalorder %s1863, 1
                  %s1868 = sphi %s1822, %s1822
                  %s1869 = sphi %s1827, %s1827
                $region136: #{rnn_model_forward.1} parent=132 // loop_header_branch
                  %1866 = sbr.rel (%p1864) target = $region140
                $region137: #{rnn_model_forward.1} parent=132 // loop_body
                  %v1870 = vld [vmem:[%s1868] sm:$0xff]
                  %1871 = vst [vmem:[%s1869] sm:$0xff] %v1870
                  %v1872 = vld [vmem:[%s1868 + $0x8] sm:$0xff]
                  %1873 = vst [vmem:[%s1869 + $0x10] sm:$0xff] %v1872
                  %v1874 = vld [vmem:[%s1868 + $0x10] sm:$0xff]
                  %1875 = vst [vmem:[%s1869 + $0x20] sm:$0xff] %v1874
                  %v1876 = vld [vmem:[%s1868 + $0x18] sm:$0xff]
                  %1877 = vst [vmem:[%s1869 + $0x30] sm:$0xff] %v1876
                  %v1878 = vld [vmem:[%s1868 + $0x20] sm:$0xff]
                  %1879 = vst [vmem:[%s1869 + $0x40] sm:$0xff] %v1878
                  %v1880 = vld [vmem:[%s1868 + $0x28] sm:$0xff]
                  %1881 = vst [vmem:[%s1869 + $0x50] sm:$0xff] %v1880
                  %v1882 = vld [vmem:[%s1868 + $0x30] sm:$0xff]
                  %1883 = vst [vmem:[%s1869 + $0x60] sm:$0xff] %v1882
                  %v1884 = vld [vmem:[%s1868 + $0x38] sm:$0xff]
                  %1885 = vst [vmem:[%s1869 + $0x70] sm:$0xff] %v1884
                $region138: #{rnn_model_forward.1} parent=132 // loop_footer
                  %s1867 = sadd.s32 1, %s1863
                $region139: #{rnn_model_forward.1} parent=132 // loop_footer_branch
                  %1862 = sbr.rel target = $region135
                $region140: #{rnn_model_forward.1} parent=132 // loop_exit
                  _
              $region133: #{rnn_model_forward.1} parent=117 // pred_fallthru
                _
              // Predicated region
              $region141: #{rnn_model_forward.1} parent=117 // pred_check
                _
              $region142: #{rnn_model_forward.1} parent=117 // pred_check_branch
                %1887 = sbr.rel target = $region144
              $region143: #{rnn_model_forward.1} parent=117 // pred_region
                _
              $region144: #{rnn_model_forward.1} parent=117 // pred_fallthru
                _
            $region118: #{rnn_model_forward.1} parent=113 // pred_fallthru
              _
            // Predicated region
            $region119: #{rnn_model_forward.1} parent=113 // pred_check
              _
            $region120: #{rnn_model_forward.1} parent=113 // pred_check_branch
              %1833 = sbr.rel target = $region122
            $region121: #{rnn_model_forward.1} parent=113 // pred_region
              %s1835 = ssub.s32 256, 1
              loop: start=0, step=1, limit=1
              $region123: #{rnn_model_forward.1} parent=121 // loop_pre_header
                _
              $region124: #{rnn_model_forward.1} parent=121 // loop_header
                %s1837 = sphi 0, %s1841
                %p1838 = scmp.ge.s32.totalorder %s1837, 1
                %s1842 = sphi %s1822, %s1822
                %s1843 = sphi %s1827, %s1827
              $region125: #{rnn_model_forward.1} parent=121 // loop_header_branch
                %1840 = sbr.rel (%p1838) target = $region129
              $region126: #{rnn_model_forward.1} parent=121 // loop_body
                %v1844 = vld [vmem:[%s1842] sm:%s1835]
                %1845 = vst [vmem:[%s1843] sm:%s1835] %v1844
                %v1846 = vld [vmem:[%s1842 + $0x8] sm:%s1835]
                %1847 = vst [vmem:[%s1843 + $0x10] sm:%s1835] %v1846
                %v1848 = vld [vmem:[%s1842 + $0x10] sm:%s1835]
                %1849 = vst [vmem:[%s1843 + $0x20] sm:%s1835] %v1848
                %v1850 = vld [vmem:[%s1842 + $0x18] sm:%s1835]
                %1851 = vst [vmem:[%s1843 + $0x30] sm:%s1835] %v1850
                %v1852 = vld [vmem:[%s1842 + $0x20] sm:%s1835]
                %1853 = vst [vmem:[%s1843 + $0x40] sm:%s1835] %v1852
                %v1854 = vld [vmem:[%s1842 + $0x28] sm:%s1835]
                %1855 = vst [vmem:[%s1843 + $0x50] sm:%s1835] %v1854
                %v1856 = vld [vmem:[%s1842 + $0x30] sm:%s1835]
                %1857 = vst [vmem:[%s1843 + $0x60] sm:%s1835] %v1856
                %v1858 = vld [vmem:[%s1842 + $0x38] sm:%s1835]
                %1859 = vst [vmem:[%s1843 + $0x70] sm:%s1835] %v1858
              $region127: #{rnn_model_forward.1} parent=121 // loop_footer
                %s1841 = sadd.s32 1, %s1837
              $region128: #{rnn_model_forward.1} parent=121 // loop_footer_branch
                %1836 = sbr.rel target = $region124
              $region129: #{rnn_model_forward.1} parent=121 // loop_exit
                _
            $region122: #{rnn_model_forward.1} parent=113 // pred_fallthru
              _
          $region114: #{rnn_model_forward.1} parent=109 // pred_fallthru
            _
          %1888 = vnop
        $region110: #{rnn_model_forward.1} parent=81 // pred_fallthru
          _
        // Predicated region
        $region145: #{rnn_model_forward.1} parent=81 // pred_check
          %p1889 = pneg %p230
        $region146: #{rnn_model_forward.1} parent=81 // pred_check_branch
          %1891 = sbr.rel (%p1889) target = $region148
        $region147: #{rnn_model_forward.1} parent=81 // pred_region
          _
        $region148: #{rnn_model_forward.1} parent=81 // pred_fallthru
          _
        // Predicated region
        $region149: #{rnn_model_forward.1} parent=81 // pred_check
          %p1892 = pneg %p230
        $region150: #{rnn_model_forward.1} parent=81 // pred_check_branch
          %1894 = sbr.rel (%p1892) target = $region152
        $region151: #{rnn_model_forward.1} parent=81 // pred_region
          _
        $region152: #{rnn_model_forward.1} parent=81 // pred_fallthru
          _
      $region82: #{rnn_model_forward.1} parent=5 // pred_fallthru
        _
      %p1895 = scmp.le.s32.totalorder 2, %s17
      // Predicated region
      $region153: #{rnn_model_forward.1} parent=5 // pred_check
        %p1896 = pneg %p1895
      $region154: #{rnn_model_forward.1} parent=5 // pred_check_branch
        %1898 = sbr.rel (%p1896) target = $region156
      $region155: #{rnn_model_forward.1} parent=5 // pred_region
        %s1899 = ssub.s32 %s17, 2
        // Predicated region
        $region157: #{rnn_model_forward.1} parent=155 // pred_check
          %p1900 = pneg %p215
        $region158: #{rnn_model_forward.1} parent=155 // pred_check_branch
          %1902 = sbr.rel (%p1900) target = $region160
        $region159: #{rnn_model_forward.1} parent=155 // pred_region
          %s1903 = sand.u32 %s200, 1
          %s1904 = sand.u32 %s200, 1
          %s1905 = smul.addr %s1904, 64
          %s1906 = scalar_lea.vmem [#allocation11], %s1905
        $region160: #{rnn_model_forward.1} parent=155 // pred_fallthru
          _
      $region156: #{rnn_model_forward.1} parent=5 // pred_fallthru
        _
    $region6: #{rnn_model_forward.1} parent=1 // loop_footer
      %s21 = sadd.s32 1, %s17
    $region7: #{rnn_model_forward.1} parent=1 // loop_footer_branch
      %16 = sbr.rel target = $region3
    $region8: #{rnn_model_forward.1} parent=1 // loop_exit
      _
    %1907 = vsyncpa [#allocation7], 1
    %s1908 = scalar_lea.sflag [#allocation7], 1
    %1909 = vsyncpa %s1908, 1
    %1910 = vsyncpa [#allocation9], 1

</llo_original>
